<compile_context>
chip_gen: v7x
topology: tpu7x:2x2x1
jax: 0.10.0
libtpu: 0.0.40
codegen_flags: <defaults>
</compile_context>

<pallas_src>
import jax
import jax.numpy as jnp
from jax.experimental import pallas as pl
from jax.experimental.pallas import tpu as pltpu

IMAGE_SIZE = 28
IN_DIM = IMAGE_SIZE * IMAGE_SIZE      # 784
H1 = 512
H2 = 256
OUT_DIM = 1

TB_MAX = 2048                         # max batch tile; <= 2048 respects v7x 64 MiB/TC


def _round_up(x, m):
    return (x + m - 1) // m * m


def _choose_batch_tiling(B):
    """Pick (tb, n_blocks).

    tb is a multiple of 16 (bf16 packs 16 rows/vreg) unless a single
    full-array block is used (block == full dim is always legal).  For
    medium/large batches the grid has >= 2 blocks so both v7x TensorCores
    get work; the last block may be partial (Pallas masks OOB writes).
    """
    n = -(-B // TB_MAX)
    if n == 1 and B > 256:
        n = 2
    tb = _round_up(-(-B // n), 16)
    if tb >= B:
        return B, 1
    return tb, -(-B // tb)


def discriminator_kernel(x_ref, w1_ref, b1_ref, w2_ref, b2_ref, w3_ref, b3_ref,
                         o_ref):
    # x streamed per batch tile as raw f32; cast to bf16 in-kernel (no extra
    # HBM pass for a pre-cast copy).
    x = x_ref[...].astype(jnp.bfloat16)                                # (tb, 784)

    h1 = jnp.dot(x, w1_ref[...], preferred_element_type=jnp.float32)   # MXU, f32 acc
    h1 = (h1 + b1_ref[...]).astype(jnp.bfloat16)                       # bias in f32, pack once
    h1 = jnp.maximum(h1, h1 * 0.2)                                     # LeakyReLU, max form, bf16

    h2 = jnp.dot(h1, w2_ref[...], preferred_element_type=jnp.float32)  # MXU, f32 acc
    h2 = h2 + b2_ref[...]
    h2 = jnp.maximum(h2, h2 * 0.2)                                     # LeakyReLU, max form, f32

    # Final 256 -> 1 layer on the VPU/XLU (broadcast mul + lane reduce)
    # instead of an N=1 MXU matmul.
    logits = jnp.sum(h2 * w3_ref[...], axis=-1, keepdims=True) + b3_ref[...]
    o_ref[...] = jax.nn.sigmoid(logits)                                # (tb, 1) f32


def discriminator_forward(img, params):
    """img: (B, 1, 28, 28) float32 NCHW. Returns (B, 1) float32 in [0, 1]."""
    w1, b1, w2, b2, w3, b3 = params
    B = img.shape[0]

    # nn.Flatten: contiguous reshape only -- no copy, no cast, no pad in HBM.
    x = img.reshape(B, IN_DIM)

    tb, n_blocks = _choose_batch_tiling(B)

    # Resident operands (constant index map keeps them in VMEM across steps).
    w1b = w1.astype(jnp.bfloat16)                    # (784, 512)
    w2b = w2.astype(jnp.bfloat16)                    # (512, 256)
    b1f = b1.reshape(1, H1).astype(jnp.float32)
    b2f = b2.reshape(1, H2).astype(jnp.float32)
    w3row = w3.reshape(1, H2).astype(jnp.float32)    # final layer as a VPU row
    b3f = b3.reshape(1, 1).astype(jnp.float32)

    resident = lambda shape: pl.BlockSpec(shape, lambda i: (0, 0))

    cost = pl.CostEstimate(
        flops=2 * B * (IN_DIM * H1 + H1 * H2 + H2),
        transcendentals=B,
        bytes_accessed=(B * IN_DIM * 4                     # x (f32, read once)
                        + (IN_DIM * H1 + H1 * H2) * 2      # w1, w2 (bf16)
                        + (H1 + H2 + H2 + 1) * 4           # biases + w3 (f32)
                        + B * OUT_DIM * 4),                # output
    )

    return pl.pallas_call(
        discriminator_kernel,
        out_shape=jax.ShapeDtypeStruct((B, OUT_DIM), jnp.float32),
        grid=(n_blocks,),
        in_specs=[
            pl.BlockSpec((tb, IN_DIM), lambda i: (i, 0)),  # x: streamed per batch tile
            resident((IN_DIM, H1)),
            resident((1, H1)),
            resident((H1, H2)),
            resident((1, H2)),
            resident((1, H2)),                             # w3 as (1, 256) row
            resident((1, 1)),
        ],
        out_specs=pl.BlockSpec((tb, OUT_DIM), lambda i: (i, 0)),
        compiler_params=pltpu.CompilerParams(
            dimension_semantics=("parallel",),
            vmem_limit_bytes=48 << 20,
        ),
        cost_estimate=cost,
    )(x, w1b, b1f, w2b, b2f, w3row, b3f)


def init_params(key):
    """Deterministic PyTorch-style uniform(-1/sqrt(fan_in), 1/sqrt(fan_in))."""
    ks = jax.random.split(key, 6)

    def linear(kw, kb, fan_in, fan_out):
        bound = 1.0 / jnp.sqrt(jnp.float32(fan_in))
        w = jax.random.uniform(kw, (fan_in, fan_out), jnp.float32, -bound, bound)
        b = jax.random.uniform(kb, (fan_out,), jnp.float32, -bound, bound)
        return w, b

    w1, b1 = linear(ks[0], ks[1], IN_DIM, H1)
    w2, b2 = linear(ks[2], ks[3], H1, H2)
    w3, b3 = linear(ks[4], ks[5], H2, OUT_DIM)
    return (w1, b1, w2, b2, w3, b3)


def reference_forward(img, params):
    """Pure-JAX f32 reference of the PyTorch forward for verification."""
    w1, b1, w2, b2, w3, b3 = params
    x = img.reshape(img.shape[0], -1)
    lrelu = lambda v: jnp.maximum(v, 0.2 * v)
    h1 = lrelu(x @ w1 + b1)
    h2 = lrelu(h1 @ w2 + b2)
    return jax.nn.sigmoid(h2 @ w3 + b3)


if __name__ == "__main__":
    key = jax.random.PRNGKey(0)
    k_img, k_img2, k_params = jax.random.split(key, 3)

    params = init_params(k_params)

    # Primary small-shape check (B=2 -> single full-array block).
    B = 2
    img = jax.random.normal(k_img, (B, 1, IMAGE_SIZE, IMAGE_SIZE), jnp.float32)
    out = jax.block_until_ready(discriminator_forward(img, params))
    ref = reference_forward(img, params)
    assert out.shape == (B, OUT_DIM), out.shape
    # bf16 matmul inputs with f32 accumulation: loosen tolerance vs the f32 ref.
    assert jnp.allclose(out, ref, atol=2e-2, rtol=2e-2), (out, ref)

    # Secondary check: multi-block grid with an uneven final block
    # (exercises the adaptive tiling / masked edge-block path).
    B2 = 300
    img2 = jax.random.normal(k_img2, (B2, 1, IMAGE_SIZE, IMAGE_SIZE), jnp.float32)
    out2 = jax.block_until_ready(discriminator_forward(img2, params))
    ref2 = reference_forward(img2, params)
    assert out2.shape == (B2, OUT_DIM), out2.shape
    assert jnp.allclose(out2, ref2, atol=2e-2, rtol=2e-2), (out2, ref2)

    print("KERNEL_OK")
</pallas_src>

<mosaic_0001>
module attributes {stable_mosaic.version = 11 : i64} {
  func.func @discriminator_kernel(%arg0: i32, %arg1: memref<2x784xf32, #tpu.memory_space<vmem>>, %arg2: memref<784x512xbf16, #tpu.memory_space<vmem>>, %arg3: memref<1x512xf32, #tpu.memory_space<vmem>>, %arg4: memref<512x256xbf16, #tpu.memory_space<vmem>>, %arg5: memref<1x256xf32, #tpu.memory_space<vmem>>, %arg6: memref<1x256xf32, #tpu.memory_space<vmem>>, %arg7: memref<1x1xf32, #tpu.memory_space<vmem>>, %arg8: memref<2x1xf32, #tpu.memory_space<vmem>>) attributes {dimension_semantics = [#tpu.dimension_semantics<parallel>], iteration_bounds = array<i64: 1>, scalar_prefetch = 0 : i64, scratch_operands = 0 : i64, tpu.core_type = #tpu.core_type<tc>, window_params = [{transform_indices = @transform_0, window_bounds = array<i64: 2, 784>}, {pipeline_mode = #tpu.pipeline_mode<synchronous>, transform_indices = @transform_1, window_bounds = array<i64: 784, 512>}, {pipeline_mode = #tpu.pipeline_mode<synchronous>, transform_indices = @transform_2, window_bounds = array<i64: 1, 512>}, {pipeline_mode = #tpu.pipeline_mode<synchronous>, transform_indices = @transform_3, window_bounds = array<i64: 512, 256>}, {pipeline_mode = #tpu.pipeline_mode<synchronous>, transform_indices = @transform_4, window_bounds = array<i64: 1, 256>}, {pipeline_mode = #tpu.pipeline_mode<synchronous>, transform_indices = @transform_5, window_bounds = array<i64: 1, 256>}, {pipeline_mode = #tpu.pipeline_mode<synchronous>, transform_indices = @transform_6, window_bounds = array<i64: 1, 1>}, {transform_indices = @transform_7, window_bounds = array<i64: 2, 1>}]} {
    %c0 = arith.constant 0 : index
    %c0_0 = arith.constant 0 : index
    %0 = vector.load %arg1[%c0, %c0_0] : memref<2x784xf32, #tpu.memory_space<vmem>>, vector<2x784xf32>
    %1 = arith.truncf %0 : vector<2x784xf32> to vector<2x784xbf16>
    %c0_1 = arith.constant 0 : index
    %c0_2 = arith.constant 0 : index
    %2 = vector.load %arg2[%c0_1, %c0_2] : memref<784x512xbf16, #tpu.memory_space<vmem>>, vector<784x512xbf16>
    %cst = arith.constant dense<0.000000e+00> : vector<2x512xf32>
    %3 = tpu.matmul %1, %2, %cst {dimension_numbers = #tpu.dot_dimension_numbers<[1], [0], [0], [1], [0, 0, 1, 1], [], []>} : vector<2x784xbf16>, vector<784x512xbf16>, vector<2x512xf32> -> vector<2x512xf32>
    %c0_3 = arith.constant 0 : index
    %c0_4 = arith.constant 0 : index
    %4 = vector.load %arg3[%c0_3, %c0_4] : memref<1x512xf32, #tpu.memory_space<vmem>>, vector<1x512xf32>
    %5 = vector.broadcast %4 : vector<1x512xf32> to vector<2x512xf32>
    %6 = arith.addf %3, %5 : vector<2x512xf32>
    %7 = arith.truncf %6 : vector<2x512xf32> to vector<2x512xbf16>
    %cst_5 = arith.constant 2.001950e-01 : bf16
    %8 = vector.broadcast %cst_5 : bf16 to vector<2x512xbf16>
    %9 = arith.mulf %7, %8 : vector<2x512xbf16>
    %10 = arith.maximumf %7, %9 : vector<2x512xbf16>
    %c0_6 = arith.constant 0 : index
    %c0_7 = arith.constant 0 : index
    %11 = vector.load %arg4[%c0_6, %c0_7] : memref<512x256xbf16, #tpu.memory_space<vmem>>, vector<512x256xbf16>
    %cst_8 = arith.constant dense<0.000000e+00> : vector<2x256xf32>
    %12 = tpu.matmul %10, %11, %cst_8 {dimension_numbers = #tpu.dot_dimension_numbers<[1], [0], [0], [1], [0, 0, 1, 1], [], []>} : vector<2x512xbf16>, vector<512x256xbf16>, vector<2x256xf32> -> vector<2x256xf32>
    %c0_9 = arith.constant 0 : index
    %c0_10 = arith.constant 0 : index
    %13 = vector.load %arg5[%c0_9, %c0_10] : memref<1x256xf32, #tpu.memory_space<vmem>>, vector<1x256xf32>
    %14 = vector.broadcast %13 : vector<1x256xf32> to vector<2x256xf32>
    %15 = arith.addf %12, %14 : vector<2x256xf32>
    %cst_11 = arith.constant 2.000000e-01 : f32
    %16 = vector.broadcast %cst_11 : f32 to vector<2x256xf32>
    %17 = arith.mulf %15, %16 : vector<2x256xf32>
    %18 = arith.maximumf %15, %17 : vector<2x256xf32>
    %c0_12 = arith.constant 0 : index
    %c0_13 = arith.constant 0 : index
    %19 = vector.load %arg6[%c0_12, %c0_13] : memref<1x256xf32, #tpu.memory_space<vmem>>, vector<1x256xf32>
    %20 = vector.broadcast %19 : vector<1x256xf32> to vector<2x256xf32>
    %21 = arith.mulf %18, %20 : vector<2x256xf32>
    %cst_14 = arith.constant dense<0.000000e+00> : vector<2xf32>
    %22 = vector.multi_reduction <add>, %21, %cst_14 [1] : vector<2x256xf32> to vector<2xf32>
    %23 = vector.shape_cast %22 : vector<2xf32> to vector<2x1xf32>
    %c0_15 = arith.constant 0 : index
    %c0_16 = arith.constant 0 : index
    %24 = vector.load %arg7[%c0_15, %c0_16] : memref<1x1xf32, #tpu.memory_space<vmem>>, vector<1x1xf32>
    %25 = vector.broadcast %24 : vector<1x1xf32> to vector<2x1xf32>
    %26 = arith.addf %23, %25 : vector<2x1xf32>
    %27 = arith.negf %26 : vector<2x1xf32>
    %28 = math.exp %27 : vector<2x1xf32>
    %cst_17 = arith.constant 1.000000e+00 : f32
    %29 = vector.broadcast %cst_17 : f32 to vector<2x1xf32>
    %30 = arith.addf %29, %28 : vector<2x1xf32>
    %31 = arith.divf %29, %30 : vector<2x1xf32>
    %c0_18 = arith.constant 0 : index
    %c0_19 = arith.constant 0 : index
    %32 = vector.load %arg8[%c0_18, %c0_19] : memref<2x1xf32, #tpu.memory_space<vmem>>, vector<2x1xf32>
    tpu.vector_store %arg8[%c0_18, %c0_19], %31 {strides = array<i32>} : memref<2x1xf32, #tpu.memory_space<vmem>>, vector<2x1xf32>,
    return
  }
  func.func @transform_0(%arg0: i32) -> (i32, i32) {
    %c0_i32 = arith.constant 0 : i32
    %c0_i32_0 = arith.constant 0 : i32
    return %arg0, %c0_i32 : i32, i32
  }
  func.func @transform_1(%arg0: i32) -> (i32, i32) {
    %c0_i32 = arith.constant 0 : i32
    %c0_i32_0 = arith.constant 0 : i32
    %c0_i32_1 = arith.constant 0 : i32
    return %c0_i32, %c0_i32_0 : i32, i32
  }
  func.func @transform_2(%arg0: i32) -> (i32, i32) {
    %c0_i32 = arith.constant 0 : i32
    %c0_i32_0 = arith.constant 0 : i32
    %c0_i32_1 = arith.constant 0 : i32
    return %c0_i32, %c0_i32_0 : i32, i32
  }
  func.func @transform_3(%arg0: i32) -> (i32, i32) {
    %c0_i32 = arith.constant 0 : i32
    %c0_i32_0 = arith.constant 0 : i32
    %c0_i32_1 = arith.constant 0 : i32
    return %c0_i32, %c0_i32_0 : i32, i32
  }
  func.func @transform_4(%arg0: i32) -> (i32, i32) {
    %c0_i32 = arith.constant 0 : i32
    %c0_i32_0 = arith.constant 0 : i32
    %c0_i32_1 = arith.constant 0 : i32
    return %c0_i32, %c0_i32_0 : i32, i32
  }
  func.func @transform_5(%arg0: i32) -> (i32, i32) {
    %c0_i32 = arith.constant 0 : i32
    %c0_i32_0 = arith.constant 0 : i32
    %c0_i32_1 = arith.constant 0 : i32
    return %c0_i32, %c0_i32_0 : i32, i32
  }
  func.func @transform_6(%arg0: i32) -> (i32, i32) {
    %c0_i32 = arith.constant 0 : i32
    %c0_i32_0 = arith.constant 0 : i32
    %c0_i32_1 = arith.constant 0 : i32
    return %c0_i32, %c0_i32_0 : i32, i32
  }
  func.func @transform_7(%arg0: i32) -> (i32, i32) {
    %c0_i32 = arith.constant 0 : i32
    %c0_i32_0 = arith.constant 0 : i32
    return %arg0, %c0_i32 : i32, i32
  }
}

</mosaic_0001>

<llo_original>
// kernel: tpu_custom_call.1
$region0: #{tpu_custom_call.1}
  #allocation0 [shape = 'u32[]', space=smem, size = 0x4, offset = 0x4, fixed_abs, tag = 'smem constant byte address 0x4 - core index']
  #allocation1 [shape = 'u32[144,128]{1,0:T(1,128)}', space=vmem, size = 0x12000, scoped, tag = 'internal scratch']
  #allocation2 [shape = 'f32[1,1]{1,0:T(1,128)S(1)}', space=vmem, size = 0x200, scoped, tag = 'scoped memory for tpu_custom_call.1']
  %s0 = inlined_call_operand.hbm [shape: f32[2,784], index: 0, kind: input, shape index: {}]
  %s1 = inlined_call_operand.hbm [shape: bf16[784,512], index: 1, kind: input, shape index: {}]
  %s2 = inlined_call_operand.vmem [shape: f32[1,512], index: 2, kind: input, shape index: {}]
  %s3 = inlined_call_operand.hbm [shape: bf16[512,256], index: 3, kind: input, shape index: {}]
  %s4 = inlined_call_operand.vmem [shape: f32[1,256], index: 4, kind: input, shape index: {}]
  %s5 = inlined_call_operand.vmem [shape: f32[1,256], index: 5, kind: input, shape index: {}]
  %s6 = inlined_call_operand.<no memory space> [shape: f32[1,1], index: 6, kind: input, shape index: {}]
  %s7 = inlined_call_operand.vmem [shape: f32[2,1], index: 7, kind: output, shape index: {}]
  %s8 = sld [smem:[#allocation0]]
  $region50: #{tpu_custom_call.1} parent=0
    _
  %s10 = ssub.s32 1, %s8
  %s11 = scalar_select 0, %s10, %s8
  %v12 = vstv %s6
  %13 = vst [vmem:[#allocation2] sm:$0x1] %v12
  $region1: #{tpu_custom_call.1} parent=0
    #allocation3 [shape = 'u8[7168]{0}', space=vmem, size = 0x1c00, scoped, tag = 'input window, operand 0, single buffered']
    #allocation4 [shape = 's32[1]{0}', space=sflag, size = 0x4, scoped, tag = 'scoped memory for tpu_custom_call.1']
    #allocation5 [shape = 'u8[802816]{0}', space=vmem, size = 0xc4000, scoped, tag = 'input window, operand 1, single buffered']
    #allocation6 [shape = 's32[1]{0}', space=sflag, size = 0x4, scoped, tag = 'scoped memory for tpu_custom_call.1']
    #allocation7 [shape = 'u8[262144]{0}', space=vmem, size = 0x40000, scoped, tag = 'input window, operand 3, single buffered']
    %14 = vsyncpa [#allocation4], 0
    %15 = vsyncpa [#allocation6], 0
    // Predicated region
    $region2: #{tpu_custom_call.1} parent=1 // pred_check
      _
    $region3: #{tpu_custom_call.1} parent=1 // pred_check_branch
      %17 = sbr.rel (0) target = $region5
    $region4: #{tpu_custom_call.1} parent=1 // pred_region
      %s19 = ssub.s32 224, 224
      %20 = vsyncadd [#allocation4], %s19
      %s22 = sshll.u32 [#allocation3], 4
      %s23 = int_to_ptr.vmem [resolvable:$true] %s22
      %25 = dma.hbm_to_vmem [thread:$0]  %s0, 224, %s23, [#allocation4]
    $region5: #{tpu_custom_call.1} parent=1 // pred_fallthru
      _
    // Predicated region
    $region6: #{tpu_custom_call.1} parent=1 // pred_check
      _
    $region7: #{tpu_custom_call.1} parent=1 // pred_check_branch
      %27 = sbr.rel (0) target = $region9
    $region8: #{tpu_custom_call.1} parent=1 // pred_region
      %s29 = ssub.s32 25088, 25088
      %30 = vsyncadd [#allocation6], %s29
      %s31 = sshll.u32 [#allocation5], 4
      %s32 = int_to_ptr.vmem [resolvable:$true] %s31
      %37 = dma.hbm_to_vmem [thread:$0]  %s1, 25088, %s32, [#allocation6], 256, 256, 16
    $region9: #{tpu_custom_call.1} parent=1 // pred_fallthru
      _
    // Predicated region
    $region10: #{tpu_custom_call.1} parent=1 // pred_check
      _
    $region11: #{tpu_custom_call.1} parent=1 // pred_check_branch
      %39 = sbr.rel (0) target = $region13
    $region12: #{tpu_custom_call.1} parent=1 // pred_region
      _
    $region13: #{tpu_custom_call.1} parent=1 // pred_fallthru
      _
    // Predicated region
    $region14: #{tpu_custom_call.1} parent=1 // pred_check
      _
    $region15: #{tpu_custom_call.1} parent=1 // pred_check_branch
      %41 = sbr.rel (0) target = $region17
    $region16: #{tpu_custom_call.1} parent=1 // pred_region
      %s43 = ssub.s32 8192, 8192
      %44 = vsyncadd [#allocation6], %s43
      %s45 = sshll.u32 [#allocation7], 4
      %s46 = int_to_ptr.vmem [resolvable:$true] %s45
      %51 = dma.hbm_to_vmem [thread:$0]  %s3, 8192, %s46, [#allocation6], 128, 128, 8
    $region17: #{tpu_custom_call.1} parent=1 // pred_fallthru
      _
    // Predicated region
    $region18: #{tpu_custom_call.1} parent=1 // pred_check
      _
    $region19: #{tpu_custom_call.1} parent=1 // pred_check_branch
      %53 = sbr.rel (0) target = $region21
    $region20: #{tpu_custom_call.1} parent=1 // pred_region
      _
    $region21: #{tpu_custom_call.1} parent=1 // pred_fallthru
      _
    // Predicated region
    $region22: #{tpu_custom_call.1} parent=1 // pred_check
      _
    $region23: #{tpu_custom_call.1} parent=1 // pred_check_branch
      %55 = sbr.rel (0) target = $region25
    $region24: #{tpu_custom_call.1} parent=1 // pred_region
      _
    $region25: #{tpu_custom_call.1} parent=1 // pred_fallthru
      _
    // Predicated region
    $region26: #{tpu_custom_call.1} parent=1 // pred_check
      _
    $region27: #{tpu_custom_call.1} parent=1 // pred_check_branch
      %57 = sbr.rel (0) target = $region29
    $region28: #{tpu_custom_call.1} parent=1 // pred_region
      _
    $region29: #{tpu_custom_call.1} parent=1 // pred_fallthru
      _
    // Predicated region
    $region30: #{tpu_custom_call.1} parent=1 // pred_check
      _
    $region31: #{tpu_custom_call.1} parent=1 // pred_check_branch
      %59 = sbr.rel (0) target = $region33
    $region32: #{tpu_custom_call.1} parent=1 // pred_region
      %60 = dma.done [#allocation4], 224
    $region33: #{tpu_custom_call.1} parent=1 // pred_fallthru
      _
    // Predicated region
    $region34: #{tpu_custom_call.1} parent=1 // pred_check
      _
    $region35: #{tpu_custom_call.1} parent=1 // pred_check_branch
      %62 = sbr.rel (0) target = $region37
    $region36: #{tpu_custom_call.1} parent=1 // pred_region
      %63 = dma.done [#allocation6], 25088
    $region37: #{tpu_custom_call.1} parent=1 // pred_fallthru
      _
    // Predicated region
    $region38: #{tpu_custom_call.1} parent=1 // pred_check
      _
    $region39: #{tpu_custom_call.1} parent=1 // pred_check_branch
      %65 = sbr.rel (0) target = $region41
    $region40: #{tpu_custom_call.1} parent=1 // pred_region
      %66 = dma.done [#allocation6], 8192
    $region41: #{tpu_custom_call.1} parent=1 // pred_fallthru
      _
    %v69 = vld [vmem:[#allocation3] sm:$0xff]
    %v70 = vld [vmem:[#allocation3 + $0x8] sm:$0x3f]
    %v73 = vcombine.high %v69, %v69
    %v75 = vunpack.c.l.s4 1983009808
    %v76 = vunpack.c.0.s8 %v75
    %v77 = vlaneseq
    %v78 = vshrl.u32 %v77, 7
    %v79 = vsub.s32 %v76, %v78
    %v80 = vrot.slane %v69, %v79
    %v82 = vunpack.c.l.s4 1983009808
    %v83 = vunpack.c.0.s8 %v82
    %v84 = vlaneseq
    %v85 = vshrl.u32 %v84, 7
    %v86 = vsub.s32 %v83, %v85
    %v87 = vrot.slane %v73, %v86
    %v88 = vcombine.high %v80, %v80
    %v89 = vcombine.high %v87, %v87
    %v90 = vcombine.high %v70, %v70
    %v92 = vunpack.c.l.s4 1983009808
    %v93 = vunpack.c.0.s8 %v92
    %v94 = vlaneseq
    %v95 = vshrl.u32 %v94, 7
    %v96 = vsub.s32 %v93, %v95
    %v97 = vrot.slane %v70, %v96
    %v99 = vunpack.c.l.s4 1983009808
    %v100 = vunpack.c.0.s8 %v99
    %v101 = vlaneseq
    %v102 = vshrl.u32 %v101, 7
    %v103 = vsub.s32 %v100, %v102
    %v104 = vrot.slane %v90, %v103
    %v105 = vcombine.high %v97, %v97
    %v113 = vpack.c.bf16 %v80, %v80
    %v114 = vpack.c.bf16 %v88, %v88
    %v115 = vpack.c.bf16 %v87, %v87
    %v116 = vpack.c.bf16 %v89, %v89
    %v117 = vpack.c.bf16 %v97, %v97
    %v118 = vpack.c.bf16 %v105, %v105
    %v119 = vpack.c.bf16 %v104, %v104
    %v120 = vld [vmem:[#allocation5] sm:$0xff]
    %v121 = vld [vmem:[#allocation5 + $0x8] sm:$0xff]
    %v122 = vld [vmem:[#allocation5 + $0x10] sm:$0xff]
    %v123 = vld [vmem:[#allocation5 + $0x18] sm:$0xff]
    %v124 = vld [vmem:[#allocation5 + $0x20] sm:$0xff]
    %v125 = vld [vmem:[#allocation5 + $0x28] sm:$0xff]
    %v126 = vld [vmem:[#allocation5 + $0x30] sm:$0xff]
    %v127 = vld [vmem:[#allocation5 + $0x38] sm:$0xff]
    %v128 = vld [vmem:[#allocation5 + $0x40] sm:$0xff]
    %v129 = vld [vmem:[#allocation5 + $0x48] sm:$0xff]
    %v130 = vld [vmem:[#allocation5 + $0x50] sm:$0xff]
    %v131 = vld [vmem:[#allocation5 + $0x58] sm:$0xff]
    %v132 = vld [vmem:[#allocation5 + $0x60] sm:$0xff]
    %v133 = vld [vmem:[#allocation5 + $0x68] sm:$0xff]
    %v134 = vld [vmem:[#allocation5 + $0x70] sm:$0xff]
    %v135 = vld [vmem:[#allocation5 + $0x78] sm:$0xff]
    %v136 = vld [vmem:[#allocation5 + $0x80] sm:$0xff]
    %v137 = vld [vmem:[#allocation5 + $0x88] sm:$0xff]
    %v138 = vld [vmem:[#allocation5 + $0x90] sm:$0xff]
    %v139 = vld [vmem:[#allocation5 + $0x98] sm:$0xff]
    %v140 = vld [vmem:[#allocation5 + $0xa0] sm:$0xff]
    %v141 = vld [vmem:[#allocation5 + $0xa8] sm:$0xff]
    %v142 = vld [vmem:[#allocation5 + $0xb0] sm:$0xff]
    %v143 = vld [vmem:[#allocation5 + $0xb8] sm:$0xff]
    %v144 = vld [vmem:[#allocation5 + $0xc0] sm:$0xff]
    %v145 = vld [vmem:[#allocation5 + $0xc8] sm:$0xff]
    %v146 = vld [vmem:[#allocation5 + $0xd0] sm:$0xff]
    %v147 = vld [vmem:[#allocation5 + $0xd8] sm:$0xff]
    %v148 = vld [vmem:[#allocation5 + $0xe0] sm:$0xff]
    %v149 = vld [vmem:[#allocation5 + $0xe8] sm:$0xff]
    %v150 = vld [vmem:[#allocation5 + $0xf0] sm:$0xff]
    %v151 = vld [vmem:[#allocation5 + $0xf8] sm:$0xff]
    %v152 = vld [vmem:[#allocation5 + $0x100] sm:$0xff]
    %v153 = vld [vmem:[#allocation5 + $0x108] sm:$0xff]
    %v154 = vld [vmem:[#allocation5 + $0x110] sm:$0xff]
    %v155 = vld [vmem:[#allocation5 + $0x118] sm:$0xff]
    %v156 = vld [vmem:[#allocation5 + $0x120] sm:$0xff]
    %v157 = vld [vmem:[#allocation5 + $0x128] sm:$0xff]
    %v158 = vld [vmem:[#allocation5 + $0x130] sm:$0xff]
    %v159 = vld [vmem:[#allocation5 + $0x138] sm:$0xff]
    %v160 = vld [vmem:[#allocation5 + $0x140] sm:$0xff]
    %v161 = vld [vmem:[#allocation5 + $0x148] sm:$0xff]
    %v162 = vld [vmem:[#allocation5 + $0x150] sm:$0xff]
    %v163 = vld [vmem:[#allocation5 + $0x158] sm:$0xff]
    %v164 = vld [vmem:[#allocation5 + $0x160] sm:$0xff]
    %v165 = vld [vmem:[#allocation5 + $0x168] sm:$0xff]
    %v166 = vld [vmem:[#allocation5 + $0x170] sm:$0xff]
    %v167 = vld [vmem:[#allocation5 + $0x178] sm:$0xff]
    %v168 = vld [vmem:[#allocation5 + $0x180] sm:$0xff]
    %v169 = vld [vmem:[#allocation5 + $0x188] sm:$0xff]
    %v170 = vld [vmem:[#allocation5 + $0x190] sm:$0xff]
    %v171 = vld [vmem:[#allocation5 + $0x198] sm:$0xff]
    %v172 = vld [vmem:[#allocation5 + $0x1a0] sm:$0xff]
    %v173 = vld [vmem:[#allocation5 + $0x1a8] sm:$0xff]
    %v174 = vld [vmem:[#allocation5 + $0x1b0] sm:$0xff]
    %v175 = vld [vmem:[#allocation5 + $0x1b8] sm:$0xff]
    %v176 = vld [vmem:[#allocation5 + $0x1c0] sm:$0xff]
    %v177 = vld [vmem:[#allocation5 + $0x1c8] sm:$0xff]
    %v178 = vld [vmem:[#allocation5 + $0x1d0] sm:$0xff]
    %v179 = vld [vmem:[#allocation5 + $0x1d8] sm:$0xff]
    %v180 = vld [vmem:[#allocation5 + $0x1e0] sm:$0xff]
    %v181 = vld [vmem:[#allocation5 + $0x1e8] sm:$0xff]
    %v182 = vld [vmem:[#allocation5 + $0x1f0] sm:$0xff]
    %v183 = vld [vmem:[#allocation5 + $0x1f8] sm:$0xff]
    %v184 = vld [vmem:[#allocation5 + $0x200] sm:$0xff]
    %v185 = vld [vmem:[#allocation5 + $0x208] sm:$0xff]
    %v186 = vld [vmem:[#allocation5 + $0x210] sm:$0xff]
    %v187 = vld [vmem:[#allocation5 + $0x218] sm:$0xff]
    %v188 = vld [vmem:[#allocation5 + $0x220] sm:$0xff]
    %v189 = vld [vmem:[#allocation5 + $0x228] sm:$0xff]
    %v190 = vld [vmem:[#allocation5 + $0x230] sm:$0xff]
    %v191 = vld [vmem:[#allocation5 + $0x238] sm:$0xff]
    %v192 = vld [vmem:[#allocation5 + $0x240] sm:$0xff]
    %v193 = vld [vmem:[#allocation5 + $0x248] sm:$0xff]
    %v194 = vld [vmem:[#allocation5 + $0x250] sm:$0xff]
    %v195 = vld [vmem:[#allocation5 + $0x258] sm:$0xff]
    %v196 = vld [vmem:[#allocation5 + $0x260] sm:$0xff]
    %v197 = vld [vmem:[#allocation5 + $0x268] sm:$0xff]
    %v198 = vld [vmem:[#allocation5 + $0x270] sm:$0xff]
    %v199 = vld [vmem:[#allocation5 + $0x278] sm:$0xff]
    %v200 = vld [vmem:[#allocation5 + $0x280] sm:$0xff]
    %v201 = vld [vmem:[#allocation5 + $0x288] sm:$0xff]
    %v202 = vld [vmem:[#allocation5 + $0x290] sm:$0xff]
    %v203 = vld [vmem:[#allocation5 + $0x298] sm:$0xff]
    %v204 = vld [vmem:[#allocation5 + $0x2a0] sm:$0xff]
    %v205 = vld [vmem:[#allocation5 + $0x2a8] sm:$0xff]
    %v206 = vld [vmem:[#allocation5 + $0x2b0] sm:$0xff]
    %v207 = vld [vmem:[#allocation5 + $0x2b8] sm:$0xff]
    %v208 = vld [vmem:[#allocation5 + $0x2c0] sm:$0xff]
    %v209 = vld [vmem:[#allocation5 + $0x2c8] sm:$0xff]
    %v210 = vld [vmem:[#allocation5 + $0x2d0] sm:$0xff]
    %v211 = vld [vmem:[#allocation5 + $0x2d8] sm:$0xff]
    %v212 = vld [vmem:[#allocation5 + $0x2e0] sm:$0xff]
    %v213 = vld [vmem:[#allocation5 + $0x2e8] sm:$0xff]
    %v214 = vld [vmem:[#allocation5 + $0x2f0] sm:$0xff]
    %v215 = vld [vmem:[#allocation5 + $0x2f8] sm:$0xff]
    %v216 = vld [vmem:[#allocation5 + $0x300] sm:$0xff]
    %v217 = vld [vmem:[#allocation5 + $0x308] sm:$0xff]
    %v218 = vld [vmem:[#allocation5 + $0x310] sm:$0xff]
    %v219 = vld [vmem:[#allocation5 + $0x318] sm:$0xff]
    %v220 = vld [vmem:[#allocation5 + $0x320] sm:$0xff]
    %v221 = vld [vmem:[#allocation5 + $0x328] sm:$0xff]
    %v222 = vld [vmem:[#allocation5 + $0x330] sm:$0xff]
    %v223 = vld [vmem:[#allocation5 + $0x338] sm:$0xff]
    %v224 = vld [vmem:[#allocation5 + $0x340] sm:$0xff]
    %v225 = vld [vmem:[#allocation5 + $0x348] sm:$0xff]
    %v226 = vld [vmem:[#allocation5 + $0x350] sm:$0xff]
    %v227 = vld [vmem:[#allocation5 + $0x358] sm:$0xff]
    %v228 = vld [vmem:[#allocation5 + $0x360] sm:$0xff]
    %v229 = vld [vmem:[#allocation5 + $0x368] sm:$0xff]
    %v230 = vld [vmem:[#allocation5 + $0x370] sm:$0xff]
    %v231 = vld [vmem:[#allocation5 + $0x378] sm:$0xff]
    %v232 = vld [vmem:[#allocation5 + $0x380] sm:$0xff]
    %v233 = vld [vmem:[#allocation5 + $0x388] sm:$0xff]
    %v234 = vld [vmem:[#allocation5 + $0x390] sm:$0xff]
    %v235 = vld [vmem:[#allocation5 + $0x398] sm:$0xff]
    %v236 = vld [vmem:[#allocation5 + $0x3a0] sm:$0xff]
    %v237 = vld [vmem:[#allocation5 + $0x3a8] sm:$0xff]
    %v238 = vld [vmem:[#allocation5 + $0x3b0] sm:$0xff]
    %v239 = vld [vmem:[#allocation5 + $0x3b8] sm:$0xff]
    %v240 = vld [vmem:[#allocation5 + $0x3c0] sm:$0xff]
    %v241 = vld [vmem:[#allocation5 + $0x3c8] sm:$0xff]
    %v242 = vld [vmem:[#allocation5 + $0x3d0] sm:$0xff]
    %v243 = vld [vmem:[#allocation5 + $0x3d8] sm:$0xff]
    %v244 = vld [vmem:[#allocation5 + $0x3e0] sm:$0xff]
    %v245 = vld [vmem:[#allocation5 + $0x3e8] sm:$0xff]
    %v246 = vld [vmem:[#allocation5 + $0x3f0] sm:$0xff]
    %v247 = vld [vmem:[#allocation5 + $0x3f8] sm:$0xff]
    %v248 = vld [vmem:[#allocation5 + $0x400] sm:$0xff]
    %v249 = vld [vmem:[#allocation5 + $0x408] sm:$0xff]
    %v250 = vld [vmem:[#allocation5 + $0x410] sm:$0xff]
    %v251 = vld [vmem:[#allocation5 + $0x418] sm:$0xff]
    %v252 = vld [vmem:[#allocation5 + $0x420] sm:$0xff]
    %v253 = vld [vmem:[#allocation5 + $0x428] sm:$0xff]
    %v254 = vld [vmem:[#allocation5 + $0x430] sm:$0xff]
    %v255 = vld [vmem:[#allocation5 + $0x438] sm:$0xff]
    %v256 = vld [vmem:[#allocation5 + $0x440] sm:$0xff]
    %v257 = vld [vmem:[#allocation5 + $0x448] sm:$0xff]
    %v258 = vld [vmem:[#allocation5 + $0x450] sm:$0xff]
    %v259 = vld [vmem:[#allocation5 + $0x458] sm:$0xff]
    %v260 = vld [vmem:[#allocation5 + $0x460] sm:$0xff]
    %v261 = vld [vmem:[#allocation5 + $0x468] sm:$0xff]
    %v262 = vld [vmem:[#allocation5 + $0x470] sm:$0xff]
    %v263 = vld [vmem:[#allocation5 + $0x478] sm:$0xff]
    %v264 = vld [vmem:[#allocation5 + $0x480] sm:$0xff]
    %v265 = vld [vmem:[#allocation5 + $0x488] sm:$0xff]
    %v266 = vld [vmem:[#allocation5 + $0x490] sm:$0xff]
    %v267 = vld [vmem:[#allocation5 + $0x498] sm:$0xff]
    %v268 = vld [vmem:[#allocation5 + $0x4a0] sm:$0xff]
    %v269 = vld [vmem:[#allocation5 + $0x4a8] sm:$0xff]
    %v270 = vld [vmem:[#allocation5 + $0x4b0] sm:$0xff]
    %v271 = vld [vmem:[#allocation5 + $0x4b8] sm:$0xff]
    %v272 = vld [vmem:[#allocation5 + $0x4c0] sm:$0xff]
    %v273 = vld [vmem:[#allocation5 + $0x4c8] sm:$0xff]
    %v274 = vld [vmem:[#allocation5 + $0x4d0] sm:$0xff]
    %v275 = vld [vmem:[#allocation5 + $0x4d8] sm:$0xff]
    %v276 = vld [vmem:[#allocation5 + $0x4e0] sm:$0xff]
    %v277 = vld [vmem:[#allocation5 + $0x4e8] sm:$0xff]
    %v278 = vld [vmem:[#allocation5 + $0x4f0] sm:$0xff]
    %v279 = vld [vmem:[#allocation5 + $0x4f8] sm:$0xff]
    %v280 = vld [vmem:[#allocation5 + $0x500] sm:$0xff]
    %v281 = vld [vmem:[#allocation5 + $0x508] sm:$0xff]
    %v282 = vld [vmem:[#allocation5 + $0x510] sm:$0xff]
    %v283 = vld [vmem:[#allocation5 + $0x518] sm:$0xff]
    %v284 = vld [vmem:[#allocation5 + $0x520] sm:$0xff]
    %v285 = vld [vmem:[#allocation5 + $0x528] sm:$0xff]
    %v286 = vld [vmem:[#allocation5 + $0x530] sm:$0xff]
    %v287 = vld [vmem:[#allocation5 + $0x538] sm:$0xff]
    %v288 = vld [vmem:[#allocation5 + $0x540] sm:$0xff]
    %v289 = vld [vmem:[#allocation5 + $0x548] sm:$0xff]
    %v290 = vld [vmem:[#allocation5 + $0x550] sm:$0xff]
    %v291 = vld [vmem:[#allocation5 + $0x558] sm:$0xff]
    %v292 = vld [vmem:[#allocation5 + $0x560] sm:$0xff]
    %v293 = vld [vmem:[#allocation5 + $0x568] sm:$0xff]
    %v294 = vld [vmem:[#allocation5 + $0x570] sm:$0xff]
    %v295 = vld [vmem:[#allocation5 + $0x578] sm:$0xff]
    %v296 = vld [vmem:[#allocation5 + $0x580] sm:$0xff]
    %v297 = vld [vmem:[#allocation5 + $0x588] sm:$0xff]
    %v298 = vld [vmem:[#allocation5 + $0x590] sm:$0xff]
    %v299 = vld [vmem:[#allocation5 + $0x598] sm:$0xff]
    %v300 = vld [vmem:[#allocation5 + $0x5a0] sm:$0xff]
    %v301 = vld [vmem:[#allocation5 + $0x5a8] sm:$0xff]
    %v302 = vld [vmem:[#allocation5 + $0x5b0] sm:$0xff]
    %v303 = vld [vmem:[#allocation5 + $0x5b8] sm:$0xff]
    %v304 = vld [vmem:[#allocation5 + $0x5c0] sm:$0xff]
    %v305 = vld [vmem:[#allocation5 + $0x5c8] sm:$0xff]
    %v306 = vld [vmem:[#allocation5 + $0x5d0] sm:$0xff]
    %v307 = vld [vmem:[#allocation5 + $0x5d8] sm:$0xff]
    %v308 = vld [vmem:[#allocation5 + $0x5e0] sm:$0xff]
    %v309 = vld [vmem:[#allocation5 + $0x5e8] sm:$0xff]
    %v310 = vld [vmem:[#allocation5 + $0x5f0] sm:$0xff]
    %v311 = vld [vmem:[#allocation5 + $0x5f8] sm:$0xff]
    %v312 = vld [vmem:[#allocation5 + $0x600] sm:$0xff]
    %v313 = vld [vmem:[#allocation5 + $0x608] sm:$0xff]
    %v314 = vld [vmem:[#allocation5 + $0x610] sm:$0xff]
    %v315 = vld [vmem:[#allocation5 + $0x618] sm:$0xff]
    %v316 = vld [vmem:[%s2] sm:$0xf]
    %v318 = vlaneseq
    %v319 = vshrl.u32 %v318, 7
    %v320 = vsub.s32 0, %v319
    %v321 = vrot.slane %v316, %v320
    %v322 = vlaneseq
    %v323 = vshrl.u32 %v322, 7
    %v324 = vsub.s32 1, %v323
    %v325 = vrot.slane %v316, %v324
    %v326 = vlaneseq
    %v327 = vshrl.u32 %v326, 7
    %v328 = vsub.s32 2, %v327
    %v329 = vrot.slane %v316, %v328
    %v330 = vlaneseq
    %v331 = vshrl.u32 %v330, 7
    %v332 = vsub.s32 3, %v331
    %v333 = vrot.slane %v316, %v332
    %v534 = vunpack.c.l.b16 %v120
    %v535 = vunpack.c.h.b16 %v120
    %v536 = vunpack.c.l.b16 %v121
    %v537 = vunpack.c.h.b16 %v121
    %v538 = vunpack.c.l.b16 %v122
    %v539 = vunpack.c.h.b16 %v122
    %v540 = vunpack.c.l.b16 %v123
    %v541 = vunpack.c.h.b16 %v123
    %v542 = vunpack.c.l.b16 %v124
    %v543 = vunpack.c.h.b16 %v124
    %v544 = vunpack.c.l.b16 %v125
    %v545 = vunpack.c.h.b16 %v125
    %v546 = vunpack.c.l.b16 %v126
    %v547 = vunpack.c.h.b16 %v126
    %v548 = vunpack.c.l.b16 %v127
    %v549 = vunpack.c.h.b16 %v127
    %v550 = vunpack.c.l.b16 %v128
    %v551 = vunpack.c.h.b16 %v128
    %v552 = vunpack.c.l.b16 %v129
    %v553 = vunpack.c.h.b16 %v129
    %v554 = vunpack.c.l.b16 %v130
    %v555 = vunpack.c.h.b16 %v130
    %v556 = vunpack.c.l.b16 %v131
    %v557 = vunpack.c.h.b16 %v131
    %v558 = vunpack.c.l.b16 %v132
    %v559 = vunpack.c.h.b16 %v132
    %v560 = vunpack.c.l.b16 %v133
    %v561 = vunpack.c.h.b16 %v133
    %v562 = vunpack.c.l.b16 %v134
    %v563 = vunpack.c.h.b16 %v134
    %v564 = vunpack.c.l.b16 %v135
    %v565 = vunpack.c.h.b16 %v135
    %v566 = vunpack.c.l.b16 %v136
    %v567 = vunpack.c.h.b16 %v136
    %v568 = vunpack.c.l.b16 %v137
    %v569 = vunpack.c.h.b16 %v137
    %v570 = vunpack.c.l.b16 %v138
    %v571 = vunpack.c.h.b16 %v138
    %v572 = vunpack.c.l.b16 %v139
    %v573 = vunpack.c.h.b16 %v139
    %v574 = vunpack.c.l.b16 %v140
    %v575 = vunpack.c.h.b16 %v140
    %v576 = vunpack.c.l.b16 %v141
    %v577 = vunpack.c.h.b16 %v141
    %v578 = vunpack.c.l.b16 %v142
    %v579 = vunpack.c.h.b16 %v142
    %v580 = vunpack.c.l.b16 %v143
    %v581 = vunpack.c.h.b16 %v143
    %v582 = vunpack.c.l.b16 %v144
    %v583 = vunpack.c.h.b16 %v144
    %v584 = vunpack.c.l.b16 %v145
    %v585 = vunpack.c.h.b16 %v145
    %v586 = vunpack.c.l.b16 %v146
    %v587 = vunpack.c.h.b16 %v146
    %v588 = vunpack.c.l.b16 %v147
    %v589 = vunpack.c.h.b16 %v147
    %v590 = vunpack.c.l.b16 %v148
    %v591 = vunpack.c.h.b16 %v148
    %v592 = vunpack.c.l.b16 %v149
    %v593 = vunpack.c.h.b16 %v149
    %v594 = vunpack.c.l.b16 %v150
    %v595 = vunpack.c.h.b16 %v150
    %v596 = vunpack.c.l.b16 %v151
    %v597 = vunpack.c.h.b16 %v151
    %v598 = vunpack.c.l.b16 %v152
    %v599 = vunpack.c.h.b16 %v152
    %v600 = vunpack.c.l.b16 %v153
    %v601 = vunpack.c.h.b16 %v153
    %v602 = vunpack.c.l.b16 %v154
    %v603 = vunpack.c.h.b16 %v154
    %v604 = vunpack.c.l.b16 %v155
    %v605 = vunpack.c.h.b16 %v155
    %v606 = vunpack.c.l.b16 %v156
    %v607 = vunpack.c.h.b16 %v156
    %v608 = vunpack.c.l.b16 %v157
    %v609 = vunpack.c.h.b16 %v157
    %v610 = vunpack.c.l.b16 %v158
    %v611 = vunpack.c.h.b16 %v158
    %v612 = vunpack.c.l.b16 %v159
    %v613 = vunpack.c.h.b16 %v159
    %v614 = vunpack.c.l.b16 %v160
    %v615 = vunpack.c.h.b16 %v160
    %v616 = vunpack.c.l.b16 %v161
    %v617 = vunpack.c.h.b16 %v161
    %v618 = vunpack.c.l.b16 %v162
    %v619 = vunpack.c.h.b16 %v162
    %v620 = vunpack.c.l.b16 %v163
    %v621 = vunpack.c.h.b16 %v163
    %v622 = vunpack.c.l.b16 %v164
    %v623 = vunpack.c.h.b16 %v164
    %v624 = vunpack.c.l.b16 %v165
    %v625 = vunpack.c.h.b16 %v165
    %v626 = vunpack.c.l.b16 %v166
    %v627 = vunpack.c.h.b16 %v166
    %v628 = vunpack.c.l.b16 %v167
    %v629 = vunpack.c.h.b16 %v167
    %v630 = vunpack.c.l.b16 %v168
    %v631 = vunpack.c.h.b16 %v168
    %v632 = vunpack.c.l.b16 %v169
    %v633 = vunpack.c.h.b16 %v169
    %v634 = vunpack.c.l.b16 %v170
    %v635 = vunpack.c.h.b16 %v170
    %v636 = vunpack.c.l.b16 %v171
    %v637 = vunpack.c.h.b16 %v171
    %v638 = vunpack.c.l.b16 %v172
    %v639 = vunpack.c.h.b16 %v172
    %v640 = vunpack.c.l.b16 %v173
    %v641 = vunpack.c.h.b16 %v173
    %v642 = vunpack.c.l.b16 %v174
    %v643 = vunpack.c.h.b16 %v174
    %v644 = vunpack.c.l.b16 %v175
    %v645 = vunpack.c.h.b16 %v175
    %v646 = vunpack.c.l.b16 %v176
    %v647 = vunpack.c.h.b16 %v176
    %v648 = vunpack.c.l.b16 %v177
    %v649 = vunpack.c.h.b16 %v177
    %v650 = vunpack.c.l.b16 %v178
    %v651 = vunpack.c.h.b16 %v178
    %v652 = vunpack.c.l.b16 %v179
    %v653 = vunpack.c.h.b16 %v179
    %v654 = vunpack.c.l.b16 %v180
    %v655 = vunpack.c.h.b16 %v180
    %v656 = vunpack.c.l.b16 %v181
    %v657 = vunpack.c.h.b16 %v181
    %v658 = vunpack.c.l.b16 %v182
    %v659 = vunpack.c.h.b16 %v182
    %v660 = vunpack.c.l.b16 %v183
    %v661 = vunpack.c.h.b16 %v183
    %v662 = vunpack.c.l.b16 %v184
    %v663 = vunpack.c.h.b16 %v184
    %v664 = vunpack.c.l.b16 %v185
    %v665 = vunpack.c.h.b16 %v185
    %v666 = vunpack.c.l.b16 %v186
    %v667 = vunpack.c.h.b16 %v186
    %v668 = vunpack.c.l.b16 %v187
    %v669 = vunpack.c.h.b16 %v187
    %v670 = vunpack.c.l.b16 %v188
    %v671 = vunpack.c.h.b16 %v188
    %v672 = vunpack.c.l.b16 %v189
    %v673 = vunpack.c.h.b16 %v189
    %v674 = vunpack.c.l.b16 %v190
    %v675 = vunpack.c.h.b16 %v190
    %v676 = vunpack.c.l.b16 %v191
    %v677 = vunpack.c.h.b16 %v191
    %v678 = vunpack.c.l.b16 %v192
    %v679 = vunpack.c.h.b16 %v192
    %v680 = vunpack.c.l.b16 %v193
    %v681 = vunpack.c.h.b16 %v193
    %v682 = vunpack.c.l.b16 %v194
    %v683 = vunpack.c.h.b16 %v194
    %v684 = vunpack.c.l.b16 %v195
    %v685 = vunpack.c.h.b16 %v195
    %v686 = vunpack.c.l.b16 %v196
    %v687 = vunpack.c.h.b16 %v196
    %v688 = vunpack.c.l.b16 %v197
    %v689 = vunpack.c.h.b16 %v197
    %v690 = vunpack.c.l.b16 %v198
    %v691 = vunpack.c.h.b16 %v198
    %v692 = vunpack.c.l.b16 %v199
    %v693 = vunpack.c.h.b16 %v199
    %v694 = vunpack.c.l.b16 %v200
    %v695 = vunpack.c.h.b16 %v200
    %v696 = vunpack.c.l.b16 %v201
    %v697 = vunpack.c.h.b16 %v201
    %v698 = vunpack.c.l.b16 %v202
    %v699 = vunpack.c.h.b16 %v202
    %v700 = vunpack.c.l.b16 %v203
    %v701 = vunpack.c.h.b16 %v203
    %v702 = vunpack.c.l.b16 %v204
    %v703 = vunpack.c.h.b16 %v204
    %v704 = vunpack.c.l.b16 %v205
    %v705 = vunpack.c.h.b16 %v205
    %v706 = vunpack.c.l.b16 %v206
    %v707 = vunpack.c.h.b16 %v206
    %v708 = vunpack.c.l.b16 %v207
    %v709 = vunpack.c.h.b16 %v207
    %v710 = vunpack.c.l.b16 %v208
    %v711 = vunpack.c.h.b16 %v208
    %v712 = vunpack.c.l.b16 %v209
    %v713 = vunpack.c.h.b16 %v209
    %v714 = vunpack.c.l.b16 %v210
    %v715 = vunpack.c.h.b16 %v210
    %v716 = vunpack.c.l.b16 %v211
    %v717 = vunpack.c.h.b16 %v211
    %v718 = vunpack.c.l.b16 %v212
    %v719 = vunpack.c.h.b16 %v212
    %v720 = vunpack.c.l.b16 %v213
    %v721 = vunpack.c.h.b16 %v213
    %v722 = vunpack.c.l.b16 %v214
    %v723 = vunpack.c.h.b16 %v214
    %v724 = vunpack.c.l.b16 %v215
    %v725 = vunpack.c.h.b16 %v215
    %v726 = vunpack.c.l.b16 %v216
    %v727 = vunpack.c.h.b16 %v216
    %v728 = vunpack.c.l.b16 %v217
    %v729 = vunpack.c.h.b16 %v217
    %v730 = vunpack.c.l.b16 %v218
    %v731 = vunpack.c.h.b16 %v218
    %v732 = vunpack.c.l.b16 %v219
    %v733 = vunpack.c.h.b16 %v219
    %v734 = vunpack.c.l.b16 %v220
    %v735 = vunpack.c.h.b16 %v220
    %v736 = vunpack.c.l.b16 %v221
    %v737 = vunpack.c.h.b16 %v221
    %v738 = vunpack.c.l.b16 %v222
    %v739 = vunpack.c.h.b16 %v222
    %v740 = vunpack.c.l.b16 %v223
    %v741 = vunpack.c.h.b16 %v223
    %v742 = vunpack.c.l.b16 %v224
    %v743 = vunpack.c.h.b16 %v224
    %v744 = vunpack.c.l.b16 %v225
    %v745 = vunpack.c.h.b16 %v225
    %v746 = vunpack.c.l.b16 %v226
    %v747 = vunpack.c.h.b16 %v226
    %v748 = vunpack.c.l.b16 %v227
    %v749 = vunpack.c.h.b16 %v227
    %v750 = vunpack.c.l.b16 %v228
    %v751 = vunpack.c.h.b16 %v228
    %v752 = vunpack.c.l.b16 %v229
    %v753 = vunpack.c.h.b16 %v229
    %v754 = vunpack.c.l.b16 %v230
    %v755 = vunpack.c.h.b16 %v230
    %v756 = vunpack.c.l.b16 %v231
    %v757 = vunpack.c.h.b16 %v231
    %v758 = vunpack.c.l.b16 %v232
    %v759 = vunpack.c.h.b16 %v232
    %v760 = vunpack.c.l.b16 %v233
    %v761 = vunpack.c.h.b16 %v233
    %v762 = vunpack.c.l.b16 %v234
    %v763 = vunpack.c.h.b16 %v234
    %v764 = vunpack.c.l.b16 %v235
    %v765 = vunpack.c.h.b16 %v235
    %v766 = vunpack.c.l.b16 %v236
    %v767 = vunpack.c.h.b16 %v236
    %v768 = vunpack.c.l.b16 %v237
    %v769 = vunpack.c.h.b16 %v237
    %v770 = vunpack.c.l.b16 %v238
    %v771 = vunpack.c.h.b16 %v238
    %v772 = vunpack.c.l.b16 %v239
    %v773 = vunpack.c.h.b16 %v239
    %v774 = vunpack.c.l.b16 %v240
    %v775 = vunpack.c.h.b16 %v240
    %v776 = vunpack.c.l.b16 %v241
    %v777 = vunpack.c.h.b16 %v241
    %v778 = vunpack.c.l.b16 %v242
    %v779 = vunpack.c.h.b16 %v242
    %v780 = vunpack.c.l.b16 %v243
    %v781 = vunpack.c.h.b16 %v243
    %v782 = vunpack.c.l.b16 %v244
    %v783 = vunpack.c.h.b16 %v244
    %v784 = vunpack.c.l.b16 %v245
    %v785 = vunpack.c.h.b16 %v245
    %v786 = vunpack.c.l.b16 %v246
    %v787 = vunpack.c.h.b16 %v246
    %v788 = vunpack.c.l.b16 %v247
    %v789 = vunpack.c.h.b16 %v247
    %v790 = vunpack.c.l.b16 %v248
    %v791 = vunpack.c.h.b16 %v248
    %v792 = vunpack.c.l.b16 %v249
    %v793 = vunpack.c.h.b16 %v249
    %v794 = vunpack.c.l.b16 %v250
    %v795 = vunpack.c.h.b16 %v250
    %v796 = vunpack.c.l.b16 %v251
    %v797 = vunpack.c.h.b16 %v251
    %v798 = vunpack.c.l.b16 %v252
    %v799 = vunpack.c.h.b16 %v252
    %v800 = vunpack.c.l.b16 %v253
    %v801 = vunpack.c.h.b16 %v253
    %v802 = vunpack.c.l.b16 %v254
    %v803 = vunpack.c.h.b16 %v254
    %v804 = vunpack.c.l.b16 %v255
    %v805 = vunpack.c.h.b16 %v255
    %v806 = vunpack.c.l.b16 %v256
    %v807 = vunpack.c.h.b16 %v256
    %v808 = vunpack.c.l.b16 %v257
    %v809 = vunpack.c.h.b16 %v257
    %v810 = vunpack.c.l.b16 %v258
    %v811 = vunpack.c.h.b16 %v258
    %v812 = vunpack.c.l.b16 %v259
    %v813 = vunpack.c.h.b16 %v259
    %v814 = vunpack.c.l.b16 %v260
    %v815 = vunpack.c.h.b16 %v260
    %v816 = vunpack.c.l.b16 %v261
    %v817 = vunpack.c.h.b16 %v261
    %v818 = vunpack.c.l.b16 %v262
    %v819 = vunpack.c.h.b16 %v262
    %v820 = vunpack.c.l.b16 %v263
    %v821 = vunpack.c.h.b16 %v263
    %v822 = vunpack.c.l.b16 %v264
    %v823 = vunpack.c.h.b16 %v264
    %v824 = vunpack.c.l.b16 %v265
    %v825 = vunpack.c.h.b16 %v265
    %v826 = vunpack.c.l.b16 %v266
    %v827 = vunpack.c.h.b16 %v266
    %v828 = vunpack.c.l.b16 %v267
    %v829 = vunpack.c.h.b16 %v267
    %v830 = vunpack.c.l.b16 %v268
    %v831 = vunpack.c.h.b16 %v268
    %v832 = vunpack.c.l.b16 %v269
    %v833 = vunpack.c.h.b16 %v269
    %v834 = vunpack.c.l.b16 %v270
    %v835 = vunpack.c.h.b16 %v270
    %v836 = vunpack.c.l.b16 %v271
    %v837 = vunpack.c.h.b16 %v271
    %v838 = vunpack.c.l.b16 %v272
    %v839 = vunpack.c.h.b16 %v272
    %v840 = vunpack.c.l.b16 %v273
    %v841 = vunpack.c.h.b16 %v273
    %v842 = vunpack.c.l.b16 %v274
    %v843 = vunpack.c.h.b16 %v274
    %v844 = vunpack.c.l.b16 %v275
    %v845 = vunpack.c.h.b16 %v275
    %v846 = vunpack.c.l.b16 %v276
    %v847 = vunpack.c.h.b16 %v276
    %v848 = vunpack.c.l.b16 %v277
    %v849 = vunpack.c.h.b16 %v277
    %v850 = vunpack.c.l.b16 %v278
    %v851 = vunpack.c.h.b16 %v278
    %v852 = vunpack.c.l.b16 %v279
    %v853 = vunpack.c.h.b16 %v279
    %v854 = vunpack.c.l.b16 %v280
    %v855 = vunpack.c.h.b16 %v280
    %v856 = vunpack.c.l.b16 %v281
    %v857 = vunpack.c.h.b16 %v281
    %v858 = vunpack.c.l.b16 %v282
    %v859 = vunpack.c.h.b16 %v282
    %v860 = vunpack.c.l.b16 %v283
    %v861 = vunpack.c.h.b16 %v283
    %v862 = vunpack.c.l.b16 %v284
    %v863 = vunpack.c.h.b16 %v284
    %v864 = vunpack.c.l.b16 %v285
    %v865 = vunpack.c.h.b16 %v285
    %v866 = vunpack.c.l.b16 %v286
    %v867 = vunpack.c.h.b16 %v286
    %v868 = vunpack.c.l.b16 %v287
    %v869 = vunpack.c.h.b16 %v287
    %v870 = vunpack.c.l.b16 %v288
    %v871 = vunpack.c.h.b16 %v288
    %v872 = vunpack.c.l.b16 %v289
    %v873 = vunpack.c.h.b16 %v289
    %v874 = vunpack.c.l.b16 %v290
    %v875 = vunpack.c.h.b16 %v290
    %v876 = vunpack.c.l.b16 %v291
    %v877 = vunpack.c.h.b16 %v291
    %v878 = vunpack.c.l.b16 %v292
    %v879 = vunpack.c.h.b16 %v292
    %v880 = vunpack.c.l.b16 %v293
    %v881 = vunpack.c.h.b16 %v293
    %v882 = vunpack.c.l.b16 %v294
    %v883 = vunpack.c.h.b16 %v294
    %v884 = vunpack.c.l.b16 %v295
    %v885 = vunpack.c.h.b16 %v295
    %v886 = vunpack.c.l.b16 %v296
    %v887 = vunpack.c.h.b16 %v296
    %v888 = vunpack.c.l.b16 %v297
    %v889 = vunpack.c.h.b16 %v297
    %v890 = vunpack.c.l.b16 %v298
    %v891 = vunpack.c.h.b16 %v298
    %v892 = vunpack.c.l.b16 %v299
    %v893 = vunpack.c.h.b16 %v299
    %v894 = vunpack.c.l.b16 %v300
    %v895 = vunpack.c.h.b16 %v300
    %v896 = vunpack.c.l.b16 %v301
    %v897 = vunpack.c.h.b16 %v301
    %v898 = vunpack.c.l.b16 %v302
    %v899 = vunpack.c.h.b16 %v302
    %v900 = vunpack.c.l.b16 %v303
    %v901 = vunpack.c.h.b16 %v303
    %v902 = vunpack.c.l.b16 %v304
    %v903 = vunpack.c.h.b16 %v304
    %v904 = vunpack.c.l.b16 %v305
    %v905 = vunpack.c.h.b16 %v305
    %v906 = vunpack.c.l.b16 %v306
    %v907 = vunpack.c.h.b16 %v306
    %v908 = vunpack.c.l.b16 %v307
    %v909 = vunpack.c.h.b16 %v307
    %v910 = vunpack.c.l.b16 %v308
    %v911 = vunpack.c.h.b16 %v308
    %v912 = vunpack.c.l.b16 %v309
    %v913 = vunpack.c.h.b16 %v309
    %v914 = vunpack.c.l.b16 %v310
    %v915 = vunpack.c.h.b16 %v310
    %v916 = vunpack.c.l.b16 %v311
    %v917 = vunpack.c.h.b16 %v311
    %v918 = vunpack.c.l.b16 %v312
    %v919 = vunpack.c.h.b16 %v312
    %v920 = vunpack.c.l.b16 %v313
    %v921 = vunpack.c.h.b16 %v313
    %v922 = vunpack.c.l.b16 %v314
    %v923 = vunpack.c.h.b16 %v314
    %v924 = vunpack.c.l.b16 %v315
    %v925 = vunpack.c.h.b16 %v315
    %v926 = vpack.c.b16 %v538, %v534
    %v927 = vpack.c.b16 %v539, %v535
    %v928 = vpack.c.b16 %v540, %v536
    %v929 = vpack.c.b16 %v541, %v537
    %v930 = vpack.c.b16 %v546, %v542
    %v931 = vpack.c.b16 %v547, %v543
    %v932 = vpack.c.b16 %v548, %v544
    %v933 = vpack.c.b16 %v549, %v545
    %v934 = vpack.c.b16 %v554, %v550
    %v935 = vpack.c.b16 %v555, %v551
    %v936 = vpack.c.b16 %v556, %v552
    %v937 = vpack.c.b16 %v557, %v553
    %v938 = vpack.c.b16 %v562, %v558
    %v939 = vpack.c.b16 %v563, %v559
    %v940 = vpack.c.b16 %v564, %v560
    %v941 = vpack.c.b16 %v565, %v561
    %v942 = vpack.c.b16 %v570, %v566
    %v943 = vpack.c.b16 %v571, %v567
    %v944 = vpack.c.b16 %v572, %v568
    %v945 = vpack.c.b16 %v573, %v569
    %v946 = vpack.c.b16 %v578, %v574
    %v947 = vpack.c.b16 %v579, %v575
    %v948 = vpack.c.b16 %v580, %v576
    %v949 = vpack.c.b16 %v581, %v577
    %v950 = vpack.c.b16 %v586, %v582
    %v951 = vpack.c.b16 %v587, %v583
    %v952 = vpack.c.b16 %v588, %v584
    %v953 = vpack.c.b16 %v589, %v585
    %v954 = vpack.c.b16 %v594, %v590
    %v955 = vpack.c.b16 %v595, %v591
    %v956 = vpack.c.b16 %v596, %v592
    %v957 = vpack.c.b16 %v597, %v593
    %v958 = vpack.c.b16 %v602, %v598
    %v959 = vpack.c.b16 %v603, %v599
    %v960 = vpack.c.b16 %v604, %v600
    %v961 = vpack.c.b16 %v605, %v601
    %v962 = vpack.c.b16 %v610, %v606
    %v963 = vpack.c.b16 %v611, %v607
    %v964 = vpack.c.b16 %v612, %v608
    %v965 = vpack.c.b16 %v613, %v609
    %v966 = vpack.c.b16 %v618, %v614
    %v967 = vpack.c.b16 %v619, %v615
    %v968 = vpack.c.b16 %v620, %v616
    %v969 = vpack.c.b16 %v621, %v617
    %v970 = vpack.c.b16 %v626, %v622
    %v971 = vpack.c.b16 %v627, %v623
    %v972 = vpack.c.b16 %v628, %v624
    %v973 = vpack.c.b16 %v629, %v625
    %v974 = vpack.c.b16 %v634, %v630
    %v975 = vpack.c.b16 %v635, %v631
    %v976 = vpack.c.b16 %v636, %v632
    %v977 = vpack.c.b16 %v637, %v633
    %v978 = vpack.c.b16 %v642, %v638
    %v979 = vpack.c.b16 %v643, %v639
    %v980 = vpack.c.b16 %v644, %v640
    %v981 = vpack.c.b16 %v645, %v641
    %v982 = vpack.c.b16 %v650, %v646
    %v983 = vpack.c.b16 %v651, %v647
    %v984 = vpack.c.b16 %v652, %v648
    %v985 = vpack.c.b16 %v653, %v649
    %v986 = vpack.c.b16 %v658, %v654
    %v987 = vpack.c.b16 %v659, %v655
    %v988 = vpack.c.b16 %v660, %v656
    %v989 = vpack.c.b16 %v661, %v657
    %v990 = vpack.c.b16 %v666, %v662
    %v991 = vpack.c.b16 %v667, %v663
    %v992 = vpack.c.b16 %v668, %v664
    %v993 = vpack.c.b16 %v669, %v665
    %v994 = vpack.c.b16 %v674, %v670
    %v995 = vpack.c.b16 %v675, %v671
    %v996 = vpack.c.b16 %v676, %v672
    %v997 = vpack.c.b16 %v677, %v673
    %v998 = vpack.c.b16 %v682, %v678
    %v999 = vpack.c.b16 %v683, %v679
    %v1000 = vpack.c.b16 %v684, %v680
    %v1001 = vpack.c.b16 %v685, %v681
    %v1002 = vpack.c.b16 %v690, %v686
    %v1003 = vpack.c.b16 %v691, %v687
    %v1004 = vpack.c.b16 %v692, %v688
    %v1005 = vpack.c.b16 %v693, %v689
    %v1006 = vpack.c.b16 %v698, %v694
    %v1007 = vpack.c.b16 %v699, %v695
    %v1008 = vpack.c.b16 %v700, %v696
    %v1009 = vpack.c.b16 %v701, %v697
    %v1010 = vpack.c.b16 %v706, %v702
    %v1011 = vpack.c.b16 %v707, %v703
    %v1012 = vpack.c.b16 %v708, %v704
    %v1013 = vpack.c.b16 %v709, %v705
    %v1014 = vpack.c.b16 %v714, %v710
    %v1015 = vpack.c.b16 %v715, %v711
    %v1016 = vpack.c.b16 %v716, %v712
    %v1017 = vpack.c.b16 %v717, %v713
    %v1018 = vpack.c.b16 %v722, %v718
    %v1019 = vpack.c.b16 %v723, %v719
    %v1020 = vpack.c.b16 %v724, %v720
    %v1021 = vpack.c.b16 %v725, %v721
    %v1022 = vpack.c.b16 %v730, %v726
    %v1023 = vpack.c.b16 %v731, %v727
    %v1024 = vpack.c.b16 %v732, %v728
    %v1025 = vpack.c.b16 %v733, %v729
    %v1026 = vpack.c.b16 %v738, %v734
    %v1027 = vpack.c.b16 %v739, %v735
    %v1028 = vpack.c.b16 %v740, %v736
    %v1029 = vpack.c.b16 %v741, %v737
    %v1030 = vpack.c.b16 %v746, %v742
    %v1031 = vpack.c.b16 %v747, %v743
    %v1032 = vpack.c.b16 %v748, %v744
    %v1033 = vpack.c.b16 %v749, %v745
    %v1034 = vpack.c.b16 %v754, %v750
    %v1035 = vpack.c.b16 %v755, %v751
    %v1036 = vpack.c.b16 %v756, %v752
    %v1037 = vpack.c.b16 %v757, %v753
    %v1038 = vpack.c.b16 %v762, %v758
    %v1039 = vpack.c.b16 %v763, %v759
    %v1040 = vpack.c.b16 %v764, %v760
    %v1041 = vpack.c.b16 %v765, %v761
    %v1042 = vpack.c.b16 %v770, %v766
    %v1043 = vpack.c.b16 %v771, %v767
    %v1044 = vpack.c.b16 %v772, %v768
    %v1045 = vpack.c.b16 %v773, %v769
    %v1046 = vpack.c.b16 %v778, %v774
    %v1047 = vpack.c.b16 %v779, %v775
    %v1048 = vpack.c.b16 %v780, %v776
    %v1049 = vpack.c.b16 %v781, %v777
    %v1050 = vpack.c.b16 %v786, %v782
    %v1051 = vpack.c.b16 %v787, %v783
    %v1052 = vpack.c.b16 %v788, %v784
    %v1053 = vpack.c.b16 %v789, %v785
    %v1054 = vpack.c.b16 %v794, %v790
    %v1055 = vpack.c.b16 %v795, %v791
    %v1056 = vpack.c.b16 %v796, %v792
    %v1057 = vpack.c.b16 %v797, %v793
    %v1058 = vpack.c.b16 %v802, %v798
    %v1059 = vpack.c.b16 %v803, %v799
    %v1060 = vpack.c.b16 %v804, %v800
    %v1061 = vpack.c.b16 %v805, %v801
    %v1062 = vpack.c.b16 %v810, %v806
    %v1063 = vpack.c.b16 %v811, %v807
    %v1064 = vpack.c.b16 %v812, %v808
    %v1065 = vpack.c.b16 %v813, %v809
    %v1066 = vpack.c.b16 %v818, %v814
    %v1067 = vpack.c.b16 %v819, %v815
    %v1068 = vpack.c.b16 %v820, %v816
    %v1069 = vpack.c.b16 %v821, %v817
    %v1070 = vpack.c.b16 %v826, %v822
    %v1071 = vpack.c.b16 %v827, %v823
    %v1072 = vpack.c.b16 %v828, %v824
    %v1073 = vpack.c.b16 %v829, %v825
    %v1074 = vpack.c.b16 %v834, %v830
    %v1075 = vpack.c.b16 %v835, %v831
    %v1076 = vpack.c.b16 %v836, %v832
    %v1077 = vpack.c.b16 %v837, %v833
    %v1078 = vpack.c.b16 %v842, %v838
    %v1079 = vpack.c.b16 %v843, %v839
    %v1080 = vpack.c.b16 %v844, %v840
    %v1081 = vpack.c.b16 %v845, %v841
    %v1082 = vpack.c.b16 %v850, %v846
    %v1083 = vpack.c.b16 %v851, %v847
    %v1084 = vpack.c.b16 %v852, %v848
    %v1085 = vpack.c.b16 %v853, %v849
    %v1086 = vpack.c.b16 %v858, %v854
    %v1087 = vpack.c.b16 %v859, %v855
    %v1088 = vpack.c.b16 %v860, %v856
    %v1089 = vpack.c.b16 %v861, %v857
    %v1090 = vpack.c.b16 %v866, %v862
    %v1091 = vpack.c.b16 %v867, %v863
    %v1092 = vpack.c.b16 %v868, %v864
    %v1093 = vpack.c.b16 %v869, %v865
    %v1094 = vpack.c.b16 %v874, %v870
    %v1095 = vpack.c.b16 %v875, %v871
    %v1096 = vpack.c.b16 %v876, %v872
    %v1097 = vpack.c.b16 %v877, %v873
    %v1098 = vpack.c.b16 %v882, %v878
    %v1099 = vpack.c.b16 %v883, %v879
    %v1100 = vpack.c.b16 %v884, %v880
    %v1101 = vpack.c.b16 %v885, %v881
    %v1102 = vpack.c.b16 %v890, %v886
    %v1103 = vpack.c.b16 %v891, %v887
    %v1104 = vpack.c.b16 %v892, %v888
    %v1105 = vpack.c.b16 %v893, %v889
    %v1106 = vpack.c.b16 %v898, %v894
    %v1107 = vpack.c.b16 %v899, %v895
    %v1108 = vpack.c.b16 %v900, %v896
    %v1109 = vpack.c.b16 %v901, %v897
    %v1110 = vpack.c.b16 %v906, %v902
    %v1111 = vpack.c.b16 %v907, %v903
    %v1112 = vpack.c.b16 %v908, %v904
    %v1113 = vpack.c.b16 %v909, %v905
    %v1114 = vpack.c.b16 %v914, %v910
    %v1115 = vpack.c.b16 %v915, %v911
    %v1116 = vpack.c.b16 %v916, %v912
    %v1117 = vpack.c.b16 %v917, %v913
    %v1118 = vpack.c.b16 %v922, %v918
    %v1119 = vpack.c.b16 %v923, %v919
    %v1120 = vpack.c.b16 %v924, %v920
    %v1121 = vpack.c.b16 %v925, %v921
    %vm1318 = vcmask 130048
    %v1320 = vsel %vm1318, %v119, 0
    %1322 = vmatprep.subr.bf16.mxu0 %v927
    %1323 = vmatpush1.bf16.msra.mxu0 %v926
    %1324 = vmatprep.subr.bf16.mxu0 %v931
    %1325 = vmatpush1.bf16.msra.mxu0 %v930
    %1326 = vmatprep.subr.bf16.mxu0 %v935
    %1327 = vmatpush1.bf16.msra.mxu0 %v934
    %1328 = vmatprep.subr.bf16.mxu0 %v939
    %1329 = vmatpush1.bf16.msra.mxu0 %v938
    %1330 = vmatprep.subr.bf16.mxu0 %v943
    %1331 = vmatpush1.bf16.msra.mxu0 %v942
    %1332 = vmatprep.subr.bf16.mxu0 %v947
    %1333 = vmatpush1.bf16.msra.mxu0 %v946
    %1334 = vmatprep.subr.bf16.mxu0 %v951
    %1335 = vmatpush1.bf16.msra.mxu0 %v950
    %1336 = vmatprep.subr.bf16.mxu0 %v955
    %1337 = vmatpush1.bf16.msra.mxu0 %v954
    %1338 = vmatprep.subr.bf16.mxu0 %v959
    %1339 = vmatpush1.bf16.msra.mxu0 %v958
    %1340 = vmatprep.subr.bf16.mxu0 %v963
    %1341 = vmatpush1.bf16.msra.mxu0 %v962
    %1342 = vmatprep.subr.bf16.mxu0 %v967
    %1343 = vmatpush1.bf16.msra.mxu0 %v966
    %1344 = vmatprep.subr.bf16.mxu0 %v971
    %1345 = vmatpush1.bf16.msra.mxu0 %v970
    %1346 = vmatprep.subr.bf16.mxu0 %v975
    %1347 = vmatpush1.bf16.msra.mxu0 %v974
    %1348 = vmatprep.subr.bf16.mxu0 %v979
    %1349 = vmatpush1.bf16.msra.mxu0 %v978
    %1350 = vmatprep.subr.bf16.mxu0 %v983
    %1351 = vmatpush1.bf16.msra.mxu0 %v982
    %1352 = vmatprep.subr.bf16.mxu0 %v987
    %1353 = vmatpush1.bf16.msra.mxu0 %v986
    %1354 = vmatprep.mubr.bf16.mxu0 %v114
    %1355 = vmatmul.mubr.bf16.gmra.mrb[0].mxu0 %v113
    %v1356 = vpop.f32.mrb[0].mxu0
    %v1357 = vadd.f32 %v321, %v1356
    %v1358 = vpop.f32.mrb[0].mxu0
    %v1359 = vadd.f32 %v325, %v1358
    %v1360 = vpop.f32.mrb[0].mxu0
    %v1361 = vpop.f32.mrb[0].mxu0
    %1362 = vdwg.mxu0
    %1363 = vmatprep.subr.bf16.mxu0 %v991
    %1364 = vmatpush1.bf16.msra.mxu0 %v990
    %1365 = vmatprep.subr.bf16.mxu0 %v995
    %1366 = vmatpush1.bf16.msra.mxu0 %v994
    %1367 = vmatprep.subr.bf16.mxu0 %v999
    %1368 = vmatpush1.bf16.msra.mxu0 %v998
    %1369 = vmatprep.subr.bf16.mxu0 %v1003
    %1370 = vmatpush1.bf16.msra.mxu0 %v1002
    %1371 = vmatprep.subr.bf16.mxu0 %v1007
    %1372 = vmatpush1.bf16.msra.mxu0 %v1006
    %1373 = vmatprep.subr.bf16.mxu0 %v1011
    %1374 = vmatpush1.bf16.msra.mxu0 %v1010
    %1375 = vmatprep.subr.bf16.mxu0 %v1015
    %1376 = vmatpush1.bf16.msra.mxu0 %v1014
    %1377 = vmatprep.subr.bf16.mxu0 %v1019
    %1378 = vmatpush1.bf16.msra.mxu0 %v1018
    %1379 = vmatprep.subr.bf16.mxu0 %v1023
    %1380 = vmatpush1.bf16.msra.mxu0 %v1022
    %1381 = vmatprep.subr.bf16.mxu0 %v1027
    %1382 = vmatpush1.bf16.msra.mxu0 %v1026
    %1383 = vmatprep.subr.bf16.mxu0 %v1031
    %1384 = vmatpush1.bf16.msra.mxu0 %v1030
    %1385 = vmatprep.subr.bf16.mxu0 %v1035
    %1386 = vmatpush1.bf16.msra.mxu0 %v1034
    %1387 = vmatprep.subr.bf16.mxu0 %v1039
    %1388 = vmatpush1.bf16.msra.mxu0 %v1038
    %1389 = vmatprep.subr.bf16.mxu0 %v1043
    %1390 = vmatpush1.bf16.msra.mxu0 %v1042
    %1391 = vmatprep.subr.bf16.mxu0 %v1047
    %1392 = vmatpush1.bf16.msra.mxu0 %v1046
    %1393 = vmatprep.subr.bf16.mxu0 %v1051
    %1394 = vmatpush1.bf16.msra.mxu0 %v1050
    %1395 = vmatprep.mubr.bf16.mxu0 %v116
    %1396 = vmatmul.mubr.bf16.gmra.mrb[0].mxu0 %v115
    %v1397 = vpop.f32.mrb[0].mxu0
    %v1398 = vadd.f32 %v1357, %v1397
    %v1399 = vpop.f32.mrb[0].mxu0
    %v1400 = vadd.f32 %v1359, %v1399
    %v1401 = vpop.f32.mrb[0].mxu0
    %v1402 = vpop.f32.mrb[0].mxu0
    %1403 = vdwg.mxu0
    %1404 = vmatprep.subr.bf16.mxu0 %v1055
    %1405 = vmatpush1.bf16.msra.mxu0 %v1054
    %1406 = vmatprep.subr.bf16.mxu0 %v1059
    %1407 = vmatpush1.bf16.msra.mxu0 %v1058
    %1408 = vmatprep.subr.bf16.mxu0 %v1063
    %1409 = vmatpush1.bf16.msra.mxu0 %v1062
    %1410 = vmatprep.subr.bf16.mxu0 %v1067
    %1411 = vmatpush1.bf16.msra.mxu0 %v1066
    %1412 = vmatprep.subr.bf16.mxu0 %v1071
    %1413 = vmatpush1.bf16.msra.mxu0 %v1070
    %1414 = vmatprep.subr.bf16.mxu0 %v1075
    %1415 = vmatpush1.bf16.msra.mxu0 %v1074
    %1416 = vmatprep.subr.bf16.mxu0 %v1079
    %1417 = vmatpush1.bf16.msra.mxu0 %v1078
    %1418 = vmatprep.subr.bf16.mxu0 %v1083
    %1419 = vmatpush1.bf16.msra.mxu0 %v1082
    %1420 = vmatprep.subr.bf16.mxu0 %v1087
    %1421 = vmatpush1.bf16.msra.mxu0 %v1086
    %1422 = vmatprep.subr.bf16.mxu0 %v1091
    %1423 = vmatpush1.bf16.msra.mxu0 %v1090
    %1424 = vmatprep.subr.bf16.mxu0 %v1095
    %1425 = vmatpush1.bf16.msra.mxu0 %v1094
    %1426 = vmatprep.subr.bf16.mxu0 %v1099
    %1427 = vmatpush1.bf16.msra.mxu0 %v1098
    %1428 = vmatprep.subr.bf16.mxu0 %v1103
    %1429 = vmatpush1.bf16.msra.mxu0 %v1102
    %1430 = vmatprep.subr.bf16.mxu0 %v1107
    %1431 = vmatpush1.bf16.msra.mxu0 %v1106
    %1432 = vmatprep.subr.bf16.mxu0 %v1111
    %1433 = vmatpush1.bf16.msra.mxu0 %v1110
    %1434 = vmatprep.subr.bf16.mxu0 %v1115
    %1435 = vmatpush1.bf16.msra.mxu0 %v1114
    %1436 = vmatprep.mubr.bf16.mxu0 %v118
    %1437 = vmatmul.mubr.bf16.gmra.mrb[0].mxu0 %v117
    %v1438 = vpop.f32.mrb[0].mxu0
    %v1439 = vadd.f32 %v1398, %v1438
    %v1440 = vpop.f32.mrb[0].mxu0
    %v1441 = vadd.f32 %v1400, %v1440
    %v1442 = vpop.f32.mrb[0].mxu0
    %v1443 = vpop.f32.mrb[0].mxu0
    %1444 = vdwg.mxu0
    %1445 = vmatprep.subr.bf16.mxu0 %v1119
    %1446 = vmatpush1.bf16.msra.mxu0 %v1118
    %1447 = vmatprep.subr.bf16.mxu0 0
    %1448 = vmatpush1.bf16.msra.mxu0 0
    %1449 = vmatprep.subr.bf16.mxu0 0
    %1450 = vmatpush1.bf16.msra.mxu0 0
    %1451 = vmatprep.subr.bf16.mxu0 0
    %1452 = vmatpush1.bf16.msra.mxu0 0
    %1453 = vmatprep.subr.bf16.mxu0 0
    %1454 = vmatpush1.bf16.msra.mxu0 0
    %1455 = vmatprep.subr.bf16.mxu0 0
    %1456 = vmatpush1.bf16.msra.mxu0 0
    %1457 = vmatprep.subr.bf16.mxu0 0
    %1458 = vmatpush1.bf16.msra.mxu0 0
    %1459 = vmatprep.subr.bf16.mxu0 0
    %1460 = vmatpush1.bf16.msra.mxu0 0
    %1461 = vmatprep.subr.bf16.mxu0 0
    %1462 = vmatpush1.bf16.msra.mxu0 0
    %1463 = vmatprep.subr.bf16.mxu0 0
    %1464 = vmatpush1.bf16.msra.mxu0 0
    %1465 = vmatprep.subr.bf16.mxu0 0
    %1466 = vmatpush1.bf16.msra.mxu0 0
    %1467 = vmatprep.subr.bf16.mxu0 0
    %1468 = vmatpush1.bf16.msra.mxu0 0
    %1469 = vmatprep.subr.bf16.mxu0 0
    %1470 = vmatpush1.bf16.msra.mxu0 0
    %1471 = vmatprep.subr.bf16.mxu0 0
    %1472 = vmatpush1.bf16.msra.mxu0 0
    %1473 = vmatprep.subr.bf16.mxu0 0
    %1474 = vmatpush1.bf16.msra.mxu0 0
    %1475 = vmatprep.subr.bf16.mxu0 0
    %1476 = vmatpush1.bf16.msra.mxu0 0
    %1477 = vmatprep.mubr.bf16.mxu0 0
    %1478 = vmatmul.mubr.bf16.gmra.mrb[0].mxu0 %v1320
    %v1479 = vpop.f32.mrb[0].mxu0
    %v1480 = vadd.f32 %v1439, %v1479
    %v1481 = vpop.f32.mrb[0].mxu0
    %v1482 = vadd.f32 %v1441, %v1481
    %v1483 = vpop.f32.mrb[0].mxu0
    %v1484 = vpop.f32.mrb[0].mxu0
    %1485 = vdwg.mxu0
    %1486 = vmatprep.subr.bf16.mxu0 %v929
    %1487 = vmatpush1.bf16.msra.mxu0 %v928
    %1488 = vmatprep.subr.bf16.mxu0 %v933
    %1489 = vmatpush1.bf16.msra.mxu0 %v932
    %1490 = vmatprep.subr.bf16.mxu0 %v937
    %1491 = vmatpush1.bf16.msra.mxu0 %v936
    %1492 = vmatprep.subr.bf16.mxu0 %v941
    %1493 = vmatpush1.bf16.msra.mxu0 %v940
    %1494 = vmatprep.subr.bf16.mxu0 %v945
    %1495 = vmatpush1.bf16.msra.mxu0 %v944
    %1496 = vmatprep.subr.bf16.mxu0 %v949
    %1497 = vmatpush1.bf16.msra.mxu0 %v948
    %1498 = vmatprep.subr.bf16.mxu0 %v953
    %1499 = vmatpush1.bf16.msra.mxu0 %v952
    %1500 = vmatprep.subr.bf16.mxu0 %v957
    %1501 = vmatpush1.bf16.msra.mxu0 %v956
    %1502 = vmatprep.subr.bf16.mxu0 %v961
    %1503 = vmatpush1.bf16.msra.mxu0 %v960
    %1504 = vmatprep.subr.bf16.mxu0 %v965
    %1505 = vmatpush1.bf16.msra.mxu0 %v964
    %1506 = vmatprep.subr.bf16.mxu0 %v969
    %1507 = vmatpush1.bf16.msra.mxu0 %v968
    %1508 = vmatprep.subr.bf16.mxu0 %v973
    %1509 = vmatpush1.bf16.msra.mxu0 %v972
    %1510 = vmatprep.subr.bf16.mxu0 %v977
    %1511 = vmatpush1.bf16.msra.mxu0 %v976
    %1512 = vmatprep.subr.bf16.mxu0 %v981
    %1513 = vmatpush1.bf16.msra.mxu0 %v980
    %1514 = vmatprep.subr.bf16.mxu0 %v985
    %1515 = vmatpush1.bf16.msra.mxu0 %v984
    %1516 = vmatprep.subr.bf16.mxu0 %v989
    %1517 = vmatpush1.bf16.msra.mxu0 %v988
    %1518 = vmatprep.mubr.bf16.mxu0 %v114
    %1519 = vmatmul.mubr.bf16.gmra.mrb[0].mxu0 %v113
    %v1520 = vpop.f32.mrb[0].mxu0
    %v1521 = vadd.f32 %v329, %v1520
    %v1522 = vpop.f32.mrb[0].mxu0
    %v1523 = vadd.f32 %v333, %v1522
    %v1524 = vpop.f32.mrb[0].mxu0
    %v1525 = vpop.f32.mrb[0].mxu0
    %1526 = vdwg.mxu0
    %1527 = vmatprep.subr.bf16.mxu0 %v993
    %1528 = vmatpush1.bf16.msra.mxu0 %v992
    %1529 = vmatprep.subr.bf16.mxu0 %v997
    %1530 = vmatpush1.bf16.msra.mxu0 %v996
    %1531 = vmatprep.subr.bf16.mxu0 %v1001
    %1532 = vmatpush1.bf16.msra.mxu0 %v1000
    %1533 = vmatprep.subr.bf16.mxu0 %v1005
    %1534 = vmatpush1.bf16.msra.mxu0 %v1004
    %1535 = vmatprep.subr.bf16.mxu0 %v1009
    %1536 = vmatpush1.bf16.msra.mxu0 %v1008
    %1537 = vmatprep.subr.bf16.mxu0 %v1013
    %1538 = vmatpush1.bf16.msra.mxu0 %v1012
    %1539 = vmatprep.subr.bf16.mxu0 %v1017
    %1540 = vmatpush1.bf16.msra.mxu0 %v1016
    %1541 = vmatprep.subr.bf16.mxu0 %v1021
    %1542 = vmatpush1.bf16.msra.mxu0 %v1020
    %1543 = vmatprep.subr.bf16.mxu0 %v1025
    %1544 = vmatpush1.bf16.msra.mxu0 %v1024
    %1545 = vmatprep.subr.bf16.mxu0 %v1029
    %1546 = vmatpush1.bf16.msra.mxu0 %v1028
    %1547 = vmatprep.subr.bf16.mxu0 %v1033
    %1548 = vmatpush1.bf16.msra.mxu0 %v1032
    %1549 = vmatprep.subr.bf16.mxu0 %v1037
    %1550 = vmatpush1.bf16.msra.mxu0 %v1036
    %1551 = vmatprep.subr.bf16.mxu0 %v1041
    %1552 = vmatpush1.bf16.msra.mxu0 %v1040
    %1553 = vmatprep.subr.bf16.mxu0 %v1045
    %1554 = vmatpush1.bf16.msra.mxu0 %v1044
    %1555 = vmatprep.subr.bf16.mxu0 %v1049
    %1556 = vmatpush1.bf16.msra.mxu0 %v1048
    %1557 = vmatprep.subr.bf16.mxu0 %v1053
    %1558 = vmatpush1.bf16.msra.mxu0 %v1052
    %1559 = vmatprep.mubr.bf16.mxu0 %v116
    %1560 = vmatmul.mubr.bf16.gmra.mrb[0].mxu0 %v115
    %v1561 = vpop.f32.mrb[0].mxu0
    %v1562 = vadd.f32 %v1521, %v1561
    %v1563 = vpop.f32.mrb[0].mxu0
    %v1564 = vadd.f32 %v1523, %v1563
    %v1565 = vpop.f32.mrb[0].mxu0
    %v1566 = vpop.f32.mrb[0].mxu0
    %1567 = vdwg.mxu0
    %1568 = vmatprep.subr.bf16.mxu0 %v1057
    %1569 = vmatpush1.bf16.msra.mxu0 %v1056
    %1570 = vmatprep.subr.bf16.mxu0 %v1061
    %1571 = vmatpush1.bf16.msra.mxu0 %v1060
    %1572 = vmatprep.subr.bf16.mxu0 %v1065
    %1573 = vmatpush1.bf16.msra.mxu0 %v1064
    %1574 = vmatprep.subr.bf16.mxu0 %v1069
    %1575 = vmatpush1.bf16.msra.mxu0 %v1068
    %1576 = vmatprep.subr.bf16.mxu0 %v1073
    %1577 = vmatpush1.bf16.msra.mxu0 %v1072
    %1578 = vmatprep.subr.bf16.mxu0 %v1077
    %1579 = vmatpush1.bf16.msra.mxu0 %v1076
    %1580 = vmatprep.subr.bf16.mxu0 %v1081
    %1581 = vmatpush1.bf16.msra.mxu0 %v1080
    %1582 = vmatprep.subr.bf16.mxu0 %v1085
    %1583 = vmatpush1.bf16.msra.mxu0 %v1084
    %1584 = vmatprep.subr.bf16.mxu0 %v1089
    %1585 = vmatpush1.bf16.msra.mxu0 %v1088
    %1586 = vmatprep.subr.bf16.mxu0 %v1093
    %1587 = vmatpush1.bf16.msra.mxu0 %v1092
    %1588 = vmatprep.subr.bf16.mxu0 %v1097
    %1589 = vmatpush1.bf16.msra.mxu0 %v1096
    %1590 = vmatprep.subr.bf16.mxu0 %v1101
    %1591 = vmatpush1.bf16.msra.mxu0 %v1100
    %1592 = vmatprep.subr.bf16.mxu0 %v1105
    %1593 = vmatpush1.bf16.msra.mxu0 %v1104
    %1594 = vmatprep.subr.bf16.mxu0 %v1109
    %1595 = vmatpush1.bf16.msra.mxu0 %v1108
    %1596 = vmatprep.subr.bf16.mxu0 %v1113
    %1597 = vmatpush1.bf16.msra.mxu0 %v1112
    %1598 = vmatprep.subr.bf16.mxu0 %v1117
    %1599 = vmatpush1.bf16.msra.mxu0 %v1116
    %1600 = vmatprep.mubr.bf16.mxu0 %v118
    %1601 = vmatmul.mubr.bf16.gmra.mrb[0].mxu0 %v117
    %v1602 = vpop.f32.mrb[0].mxu0
    %v1603 = vadd.f32 %v1562, %v1602
    %v1604 = vpop.f32.mrb[0].mxu0
    %v1605 = vadd.f32 %v1564, %v1604
    %v1606 = vpop.f32.mrb[0].mxu0
    %v1607 = vpop.f32.mrb[0].mxu0
    %1608 = vdwg.mxu0
    %1609 = vmatprep.subr.bf16.mxu0 %v1121
    %1610 = vmatpush1.bf16.msra.mxu0 %v1120
    %1611 = vmatprep.subr.bf16.mxu0 0
    %1612 = vmatpush1.bf16.msra.mxu0 0
    %1613 = vmatprep.subr.bf16.mxu0 0
    %1614 = vmatpush1.bf16.msra.mxu0 0
    %1615 = vmatprep.subr.bf16.mxu0 0
    %1616 = vmatpush1.bf16.msra.mxu0 0
    %1617 = vmatprep.subr.bf16.mxu0 0
    %1618 = vmatpush1.bf16.msra.mxu0 0
    %1619 = vmatprep.subr.bf16.mxu0 0
    %1620 = vmatpush1.bf16.msra.mxu0 0
    %1621 = vmatprep.subr.bf16.mxu0 0
    %1622 = vmatpush1.bf16.msra.mxu0 0
    %1623 = vmatprep.subr.bf16.mxu0 0
    %1624 = vmatpush1.bf16.msra.mxu0 0
    %1625 = vmatprep.subr.bf16.mxu0 0
    %1626 = vmatpush1.bf16.msra.mxu0 0
    %1627 = vmatprep.subr.bf16.mxu0 0
    %1628 = vmatpush1.bf16.msra.mxu0 0
    %1629 = vmatprep.subr.bf16.mxu0 0
    %1630 = vmatpush1.bf16.msra.mxu0 0
    %1631 = vmatprep.subr.bf16.mxu0 0
    %1632 = vmatpush1.bf16.msra.mxu0 0
    %1633 = vmatprep.subr.bf16.mxu0 0
    %1634 = vmatpush1.bf16.msra.mxu0 0
    %1635 = vmatprep.subr.bf16.mxu0 0
    %1636 = vmatpush1.bf16.msra.mxu0 0
    %1637 = vmatprep.subr.bf16.mxu0 0
    %1638 = vmatpush1.bf16.msra.mxu0 0
    %1639 = vmatprep.subr.bf16.mxu0 0
    %1640 = vmatpush1.bf16.msra.mxu0 0
    %1641 = vmatprep.mubr.bf16.mxu0 0
    %1642 = vmatmul.mubr.bf16.gmra.mrb[0].mxu0 %v1320
    %v1643 = vpop.f32.mrb[0].mxu0
    %v1644 = vadd.f32 %v1603, %v1643
    %v1645 = vpop.f32.mrb[0].mxu0
    %v1646 = vadd.f32 %v1605, %v1645
    %v1647 = vpop.f32.mrb[0].mxu0
    %v1648 = vpop.f32.mrb[0].mxu0
    %1649 = vdwg.mxu0
    %v1650 = vpack.c.bf16 %v1480, %v1480
    %v1651 = vpack.c.bf16 %v1482, %v1482
    %v1652 = vpack.c.bf16 %v1644, %v1644
    %v1653 = vpack.c.bf16 %v1646, %v1646
    %v1654 = vmul.bf16 %v1650, 1045249613
    %v1655 = vmul.bf16 %v1651, 1045249613
    %v1656 = vmul.bf16 %v1652, 1045249613
    %v1657 = vmul.bf16 %v1653, 1045249613
    %v1658 = vmax.bf16 %v1650, %v1654
    %v1659 = vmax.bf16 %v1651, %v1655
    %v1660 = vmax.bf16 %v1652, %v1656
    %v1661 = vmax.bf16 %v1653, %v1657
    %v1662 = vld [vmem:[#allocation7] sm:$0xff]
    %v1663 = vld [vmem:[#allocation7 + $0x8] sm:$0xff]
    %v1664 = vld [vmem:[#allocation7 + $0x10] sm:$0xff]
    %v1665 = vld [vmem:[#allocation7 + $0x18] sm:$0xff]
    %v1666 = vld [vmem:[#allocation7 + $0x20] sm:$0xff]
    %v1667 = vld [vmem:[#allocation7 + $0x28] sm:$0xff]
    %v1668 = vld [vmem:[#allocation7 + $0x30] sm:$0xff]
    %v1669 = vld [vmem:[#allocation7 + $0x38] sm:$0xff]
    %v1670 = vld [vmem:[#allocation7 + $0x40] sm:$0xff]
    %v1671 = vld [vmem:[#allocation7 + $0x48] sm:$0xff]
    %v1672 = vld [vmem:[#allocation7 + $0x50] sm:$0xff]
    %v1673 = vld [vmem:[#allocation7 + $0x58] sm:$0xff]
    %v1674 = vld [vmem:[#allocation7 + $0x60] sm:$0xff]
    %v1675 = vld [vmem:[#allocation7 + $0x68] sm:$0xff]
    %v1676 = vld [vmem:[#allocation7 + $0x70] sm:$0xff]
    %v1677 = vld [vmem:[#allocation7 + $0x78] sm:$0xff]
    %v1678 = vld [vmem:[#allocation7 + $0x80] sm:$0xff]
    %v1679 = vld [vmem:[#allocation7 + $0x88] sm:$0xff]
    %v1680 = vld [vmem:[#allocation7 + $0x90] sm:$0xff]
    %v1681 = vld [vmem:[#allocation7 + $0x98] sm:$0xff]
    %v1682 = vld [vmem:[#allocation7 + $0xa0] sm:$0xff]
    %v1683 = vld [vmem:[#allocation7 + $0xa8] sm:$0xff]
    %v1684 = vld [vmem:[#allocation7 + $0xb0] sm:$0xff]
    %v1685 = vld [vmem:[#allocation7 + $0xb8] sm:$0xff]
    %v1686 = vld [vmem:[#allocation7 + $0xc0] sm:$0xff]
    %v1687 = vld [vmem:[#allocation7 + $0xc8] sm:$0xff]
    %v1688 = vld [vmem:[#allocation7 + $0xd0] sm:$0xff]
    %v1689 = vld [vmem:[#allocation7 + $0xd8] sm:$0xff]
    %v1690 = vld [vmem:[#allocation7 + $0xe0] sm:$0xff]
    %v1691 = vld [vmem:[#allocation7 + $0xe8] sm:$0xff]
    %v1692 = vld [vmem:[#allocation7 + $0xf0] sm:$0xff]
    %v1693 = vld [vmem:[#allocation7 + $0xf8] sm:$0xff]
    %v1694 = vld [vmem:[#allocation7 + $0x100] sm:$0xff]
    %v1695 = vld [vmem:[#allocation7 + $0x108] sm:$0xff]
    %v1696 = vld [vmem:[#allocation7 + $0x110] sm:$0xff]
    %v1697 = vld [vmem:[#allocation7 + $0x118] sm:$0xff]
    %v1698 = vld [vmem:[#allocation7 + $0x120] sm:$0xff]
    %v1699 = vld [vmem:[#allocation7 + $0x128] sm:$0xff]
    %v1700 = vld [vmem:[#allocation7 + $0x130] sm:$0xff]
    %v1701 = vld [vmem:[#allocation7 + $0x138] sm:$0xff]
    %v1702 = vld [vmem:[#allocation7 + $0x140] sm:$0xff]
    %v1703 = vld [vmem:[#allocation7 + $0x148] sm:$0xff]
    %v1704 = vld [vmem:[#allocation7 + $0x150] sm:$0xff]
    %v1705 = vld [vmem:[#allocation7 + $0x158] sm:$0xff]
    %v1706 = vld [vmem:[#allocation7 + $0x160] sm:$0xff]
    %v1707 = vld [vmem:[#allocation7 + $0x168] sm:$0xff]
    %v1708 = vld [vmem:[#allocation7 + $0x170] sm:$0xff]
    %v1709 = vld [vmem:[#allocation7 + $0x178] sm:$0xff]
    %v1710 = vld [vmem:[#allocation7 + $0x180] sm:$0xff]
    %v1711 = vld [vmem:[#allocation7 + $0x188] sm:$0xff]
    %v1712 = vld [vmem:[#allocation7 + $0x190] sm:$0xff]
    %v1713 = vld [vmem:[#allocation7 + $0x198] sm:$0xff]
    %v1714 = vld [vmem:[#allocation7 + $0x1a0] sm:$0xff]
    %v1715 = vld [vmem:[#allocation7 + $0x1a8] sm:$0xff]
    %v1716 = vld [vmem:[#allocation7 + $0x1b0] sm:$0xff]
    %v1717 = vld [vmem:[#allocation7 + $0x1b8] sm:$0xff]
    %v1718 = vld [vmem:[#allocation7 + $0x1c0] sm:$0xff]
    %v1719 = vld [vmem:[#allocation7 + $0x1c8] sm:$0xff]
    %v1720 = vld [vmem:[#allocation7 + $0x1d0] sm:$0xff]
    %v1721 = vld [vmem:[#allocation7 + $0x1d8] sm:$0xff]
    %v1722 = vld [vmem:[#allocation7 + $0x1e0] sm:$0xff]
    %v1723 = vld [vmem:[#allocation7 + $0x1e8] sm:$0xff]
    %v1724 = vld [vmem:[#allocation7 + $0x1f0] sm:$0xff]
    %v1725 = vld [vmem:[#allocation7 + $0x1f8] sm:$0xff]
    %v1726 = vld [vmem:[%s4] sm:$0x3]
    %v1728 = vlaneseq
    %v1729 = vshrl.u32 %v1728, 7
    %v1730 = vsub.s32 0, %v1729
    %v1731 = vrot.slane %v1726, %v1730
    %v1732 = vlaneseq
    %v1733 = vshrl.u32 %v1732, 7
    %v1734 = vsub.s32 1, %v1733
    %v1735 = vrot.slane %v1726, %v1734
    %v1802 = vunpack.c.l.b16 %v1662
    %v1803 = vunpack.c.h.b16 %v1662
    %v1804 = vunpack.c.l.b16 %v1663
    %v1805 = vunpack.c.h.b16 %v1663
    %v1806 = vunpack.c.l.b16 %v1664
    %v1807 = vunpack.c.h.b16 %v1664
    %v1808 = vunpack.c.l.b16 %v1665
    %v1809 = vunpack.c.h.b16 %v1665
    %v1810 = vunpack.c.l.b16 %v1666
    %v1811 = vunpack.c.h.b16 %v1666
    %v1812 = vunpack.c.l.b16 %v1667
    %v1813 = vunpack.c.h.b16 %v1667
    %v1814 = vunpack.c.l.b16 %v1668
    %v1815 = vunpack.c.h.b16 %v1668
    %v1816 = vunpack.c.l.b16 %v1669
    %v1817 = vunpack.c.h.b16 %v1669
    %v1818 = vunpack.c.l.b16 %v1670
    %v1819 = vunpack.c.h.b16 %v1670
    %v1820 = vunpack.c.l.b16 %v1671
    %v1821 = vunpack.c.h.b16 %v1671
    %v1822 = vunpack.c.l.b16 %v1672
    %v1823 = vunpack.c.h.b16 %v1672
    %v1824 = vunpack.c.l.b16 %v1673
    %v1825 = vunpack.c.h.b16 %v1673
    %v1826 = vunpack.c.l.b16 %v1674
    %v1827 = vunpack.c.h.b16 %v1674
    %v1828 = vunpack.c.l.b16 %v1675
    %v1829 = vunpack.c.h.b16 %v1675
    %v1830 = vunpack.c.l.b16 %v1676
    %v1831 = vunpack.c.h.b16 %v1676
    %v1832 = vunpack.c.l.b16 %v1677
    %v1833 = vunpack.c.h.b16 %v1677
    %v1834 = vunpack.c.l.b16 %v1678
    %v1835 = vunpack.c.h.b16 %v1678
    %v1836 = vunpack.c.l.b16 %v1679
    %v1837 = vunpack.c.h.b16 %v1679
    %v1838 = vunpack.c.l.b16 %v1680
    %v1839 = vunpack.c.h.b16 %v1680
    %v1840 = vunpack.c.l.b16 %v1681
    %v1841 = vunpack.c.h.b16 %v1681
    %v1842 = vunpack.c.l.b16 %v1682
    %v1843 = vunpack.c.h.b16 %v1682
    %v1844 = vunpack.c.l.b16 %v1683
    %v1845 = vunpack.c.h.b16 %v1683
    %v1846 = vunpack.c.l.b16 %v1684
    %v1847 = vunpack.c.h.b16 %v1684
    %v1848 = vunpack.c.l.b16 %v1685
    %v1849 = vunpack.c.h.b16 %v1685
    %v1850 = vunpack.c.l.b16 %v1686
    %v1851 = vunpack.c.h.b16 %v1686
    %v1852 = vunpack.c.l.b16 %v1687
    %v1853 = vunpack.c.h.b16 %v1687
    %v1854 = vunpack.c.l.b16 %v1688
    %v1855 = vunpack.c.h.b16 %v1688
    %v1856 = vunpack.c.l.b16 %v1689
    %v1857 = vunpack.c.h.b16 %v1689
    %v1858 = vunpack.c.l.b16 %v1690
    %v1859 = vunpack.c.h.b16 %v1690
    %v1860 = vunpack.c.l.b16 %v1691
    %v1861 = vunpack.c.h.b16 %v1691
    %v1862 = vunpack.c.l.b16 %v1692
    %v1863 = vunpack.c.h.b16 %v1692
    %v1864 = vunpack.c.l.b16 %v1693
    %v1865 = vunpack.c.h.b16 %v1693
    %v1866 = vunpack.c.l.b16 %v1694
    %v1867 = vunpack.c.h.b16 %v1694
    %v1868 = vunpack.c.l.b16 %v1695
    %v1869 = vunpack.c.h.b16 %v1695
    %v1870 = vunpack.c.l.b16 %v1696
    %v1871 = vunpack.c.h.b16 %v1696
    %v1872 = vunpack.c.l.b16 %v1697
    %v1873 = vunpack.c.h.b16 %v1697
    %v1874 = vunpack.c.l.b16 %v1698
    %v1875 = vunpack.c.h.b16 %v1698
    %v1876 = vunpack.c.l.b16 %v1699
    %v1877 = vunpack.c.h.b16 %v1699
    %v1878 = vunpack.c.l.b16 %v1700
    %v1879 = vunpack.c.h.b16 %v1700
    %v1880 = vunpack.c.l.b16 %v1701
    %v1881 = vunpack.c.h.b16 %v1701
    %v1882 = vunpack.c.l.b16 %v1702
    %v1883 = vunpack.c.h.b16 %v1702
    %v1884 = vunpack.c.l.b16 %v1703
    %v1885 = vunpack.c.h.b16 %v1703
    %v1886 = vunpack.c.l.b16 %v1704
    %v1887 = vunpack.c.h.b16 %v1704
    %v1888 = vunpack.c.l.b16 %v1705
    %v1889 = vunpack.c.h.b16 %v1705
    %v1890 = vunpack.c.l.b16 %v1706
    %v1891 = vunpack.c.h.b16 %v1706
    %v1892 = vunpack.c.l.b16 %v1707
    %v1893 = vunpack.c.h.b16 %v1707
    %v1894 = vunpack.c.l.b16 %v1708
    %v1895 = vunpack.c.h.b16 %v1708
    %v1896 = vunpack.c.l.b16 %v1709
    %v1897 = vunpack.c.h.b16 %v1709
    %v1898 = vunpack.c.l.b16 %v1710
    %v1899 = vunpack.c.h.b16 %v1710
    %v1900 = vunpack.c.l.b16 %v1711
    %v1901 = vunpack.c.h.b16 %v1711
    %v1902 = vunpack.c.l.b16 %v1712
    %v1903 = vunpack.c.h.b16 %v1712
    %v1904 = vunpack.c.l.b16 %v1713
    %v1905 = vunpack.c.h.b16 %v1713
    %v1906 = vunpack.c.l.b16 %v1714
    %v1907 = vunpack.c.h.b16 %v1714
    %v1908 = vunpack.c.l.b16 %v1715
    %v1909 = vunpack.c.h.b16 %v1715
    %v1910 = vunpack.c.l.b16 %v1716
    %v1911 = vunpack.c.h.b16 %v1716
    %v1912 = vunpack.c.l.b16 %v1717
    %v1913 = vunpack.c.h.b16 %v1717
    %v1914 = vunpack.c.l.b16 %v1718
    %v1915 = vunpack.c.h.b16 %v1718
    %v1916 = vunpack.c.l.b16 %v1719
    %v1917 = vunpack.c.h.b16 %v1719
    %v1918 = vunpack.c.l.b16 %v1720
    %v1919 = vunpack.c.h.b16 %v1720
    %v1920 = vunpack.c.l.b16 %v1721
    %v1921 = vunpack.c.h.b16 %v1721
    %v1922 = vunpack.c.l.b16 %v1722
    %v1923 = vunpack.c.h.b16 %v1722
    %v1924 = vunpack.c.l.b16 %v1723
    %v1925 = vunpack.c.h.b16 %v1723
    %v1926 = vunpack.c.l.b16 %v1724
    %v1927 = vunpack.c.h.b16 %v1724
    %v1928 = vunpack.c.l.b16 %v1725
    %v1929 = vunpack.c.h.b16 %v1725
    %v1930 = vpack.c.b16 %v1804, %v1802
    %v1931 = vpack.c.b16 %v1805, %v1803
    %v1932 = vpack.c.b16 %v1808, %v1806
    %v1933 = vpack.c.b16 %v1809, %v1807
    %v1934 = vpack.c.b16 %v1812, %v1810
    %v1935 = vpack.c.b16 %v1813, %v1811
    %v1936 = vpack.c.b16 %v1816, %v1814
    %v1937 = vpack.c.b16 %v1817, %v1815
    %v1938 = vpack.c.b16 %v1820, %v1818
    %v1939 = vpack.c.b16 %v1821, %v1819
    %v1940 = vpack.c.b16 %v1824, %v1822
    %v1941 = vpack.c.b16 %v1825, %v1823
    %v1942 = vpack.c.b16 %v1828, %v1826
    %v1943 = vpack.c.b16 %v1829, %v1827
    %v1944 = vpack.c.b16 %v1832, %v1830
    %v1945 = vpack.c.b16 %v1833, %v1831
    %v1946 = vpack.c.b16 %v1836, %v1834
    %v1947 = vpack.c.b16 %v1837, %v1835
    %v1948 = vpack.c.b16 %v1840, %v1838
    %v1949 = vpack.c.b16 %v1841, %v1839
    %v1950 = vpack.c.b16 %v1844, %v1842
    %v1951 = vpack.c.b16 %v1845, %v1843
    %v1952 = vpack.c.b16 %v1848, %v1846
    %v1953 = vpack.c.b16 %v1849, %v1847
    %v1954 = vpack.c.b16 %v1852, %v1850
    %v1955 = vpack.c.b16 %v1853, %v1851
    %v1956 = vpack.c.b16 %v1856, %v1854
    %v1957 = vpack.c.b16 %v1857, %v1855
    %v1958 = vpack.c.b16 %v1860, %v1858
    %v1959 = vpack.c.b16 %v1861, %v1859
    %v1960 = vpack.c.b16 %v1864, %v1862
    %v1961 = vpack.c.b16 %v1865, %v1863
    %v1962 = vpack.c.b16 %v1868, %v1866
    %v1963 = vpack.c.b16 %v1869, %v1867
    %v1964 = vpack.c.b16 %v1872, %v1870
    %v1965 = vpack.c.b16 %v1873, %v1871
    %v1966 = vpack.c.b16 %v1876, %v1874
    %v1967 = vpack.c.b16 %v1877, %v1875
    %v1968 = vpack.c.b16 %v1880, %v1878
    %v1969 = vpack.c.b16 %v1881, %v1879
    %v1970 = vpack.c.b16 %v1884, %v1882
    %v1971 = vpack.c.b16 %v1885, %v1883
    %v1972 = vpack.c.b16 %v1888, %v1886
    %v1973 = vpack.c.b16 %v1889, %v1887
    %v1974 = vpack.c.b16 %v1892, %v1890
    %v1975 = vpack.c.b16 %v1893, %v1891
    %v1976 = vpack.c.b16 %v1896, %v1894
    %v1977 = vpack.c.b16 %v1897, %v1895
    %v1978 = vpack.c.b16 %v1900, %v1898
    %v1979 = vpack.c.b16 %v1901, %v1899
    %v1980 = vpack.c.b16 %v1904, %v1902
    %v1981 = vpack.c.b16 %v1905, %v1903
    %v1982 = vpack.c.b16 %v1908, %v1906
    %v1983 = vpack.c.b16 %v1909, %v1907
    %v1984 = vpack.c.b16 %v1912, %v1910
    %v1985 = vpack.c.b16 %v1913, %v1911
    %v1986 = vpack.c.b16 %v1916, %v1914
    %v1987 = vpack.c.b16 %v1917, %v1915
    %v1988 = vpack.c.b16 %v1920, %v1918
    %v1989 = vpack.c.b16 %v1921, %v1919
    %v1990 = vpack.c.b16 %v1924, %v1922
    %v1991 = vpack.c.b16 %v1925, %v1923
    %v1992 = vpack.c.b16 %v1928, %v1926
    %v1993 = vpack.c.b16 %v1929, %v1927
    %2058 = vmatprep.subr.bf16.mxu0 %v1931
    %2059 = vmatpush1.bf16.msra.mxu0 %v1930
    %2060 = vmatprep.subr.bf16.mxu0 %v1933
    %2061 = vmatpush1.bf16.msra.mxu0 %v1932
    %2062 = vmatprep.subr.bf16.mxu0 %v1935
    %2063 = vmatpush1.bf16.msra.mxu0 %v1934
    %2064 = vmatprep.subr.bf16.mxu0 %v1937
    %2065 = vmatpush1.bf16.msra.mxu0 %v1936
    %2066 = vmatprep.subr.bf16.mxu0 %v1939
    %2067 = vmatpush1.bf16.msra.mxu0 %v1938
    %2068 = vmatprep.subr.bf16.mxu0 %v1941
    %2069 = vmatpush1.bf16.msra.mxu0 %v1940
    %2070 = vmatprep.subr.bf16.mxu0 %v1943
    %2071 = vmatpush1.bf16.msra.mxu0 %v1942
    %2072 = vmatprep.subr.bf16.mxu0 %v1945
    %2073 = vmatpush1.bf16.msra.mxu0 %v1944
    %2074 = vmatprep.subr.bf16.mxu0 %v1947
    %2075 = vmatpush1.bf16.msra.mxu0 %v1946
    %2076 = vmatprep.subr.bf16.mxu0 %v1949
    %2077 = vmatpush1.bf16.msra.mxu0 %v1948
    %2078 = vmatprep.subr.bf16.mxu0 %v1951
    %2079 = vmatpush1.bf16.msra.mxu0 %v1950
    %2080 = vmatprep.subr.bf16.mxu0 %v1953
    %2081 = vmatpush1.bf16.msra.mxu0 %v1952
    %2082 = vmatprep.subr.bf16.mxu0 %v1955
    %2083 = vmatpush1.bf16.msra.mxu0 %v1954
    %2084 = vmatprep.subr.bf16.mxu0 %v1957
    %2085 = vmatpush1.bf16.msra.mxu0 %v1956
    %2086 = vmatprep.subr.bf16.mxu0 %v1959
    %2087 = vmatpush1.bf16.msra.mxu0 %v1958
    %2088 = vmatprep.subr.bf16.mxu0 %v1961
    %2089 = vmatpush1.bf16.msra.mxu0 %v1960
    %2090 = vmatprep.mubr.bf16.mxu0 %v1659
    %2091 = vmatmul.mubr.bf16.gmra.mrb[0].mxu0 %v1658
    %v2092 = vpop.f32.mrb[0].mxu0
    %v2093 = vadd.f32 %v1731, %v2092
    %v2094 = vpop.f32.mrb[0].mxu0
    %v2095 = vadd.f32 %v1735, %v2094
    %v2096 = vpop.f32.mrb[0].mxu0
    %v2097 = vpop.f32.mrb[0].mxu0
    %2098 = vdwg.mxu0
    %2099 = vmatprep.subr.bf16.mxu0 %v1963
    %2100 = vmatpush1.bf16.msra.mxu0 %v1962
    %2101 = vmatprep.subr.bf16.mxu0 %v1965
    %2102 = vmatpush1.bf16.msra.mxu0 %v1964
    %2103 = vmatprep.subr.bf16.mxu0 %v1967
    %2104 = vmatpush1.bf16.msra.mxu0 %v1966
    %2105 = vmatprep.subr.bf16.mxu0 %v1969
    %2106 = vmatpush1.bf16.msra.mxu0 %v1968
    %2107 = vmatprep.subr.bf16.mxu0 %v1971
    %2108 = vmatpush1.bf16.msra.mxu0 %v1970
    %2109 = vmatprep.subr.bf16.mxu0 %v1973
    %2110 = vmatpush1.bf16.msra.mxu0 %v1972
    %2111 = vmatprep.subr.bf16.mxu0 %v1975
    %2112 = vmatpush1.bf16.msra.mxu0 %v1974
    %2113 = vmatprep.subr.bf16.mxu0 %v1977
    %2114 = vmatpush1.bf16.msra.mxu0 %v1976
    %2115 = vmatprep.subr.bf16.mxu0 %v1979
    %2116 = vmatpush1.bf16.msra.mxu0 %v1978
    %2117 = vmatprep.subr.bf16.mxu0 %v1981
    %2118 = vmatpush1.bf16.msra.mxu0 %v1980
    %2119 = vmatprep.subr.bf16.mxu0 %v1983
    %2120 = vmatpush1.bf16.msra.mxu0 %v1982
    %2121 = vmatprep.subr.bf16.mxu0 %v1985
    %2122 = vmatpush1.bf16.msra.mxu0 %v1984
    %2123 = vmatprep.subr.bf16.mxu0 %v1987
    %2124 = vmatpush1.bf16.msra.mxu0 %v1986
    %2125 = vmatprep.subr.bf16.mxu0 %v1989
    %2126 = vmatpush1.bf16.msra.mxu0 %v1988
    %2127 = vmatprep.subr.bf16.mxu0 %v1991
    %2128 = vmatpush1.bf16.msra.mxu0 %v1990
    %2129 = vmatprep.subr.bf16.mxu0 %v1993
    %2130 = vmatpush1.bf16.msra.mxu0 %v1992
    %2131 = vmatprep.mubr.bf16.mxu0 %v1661
    %2132 = vmatmul.mubr.bf16.gmra.mrb[0].mxu0 %v1660
    %v2133 = vpop.f32.mrb[0].mxu0
    %v2134 = vadd.f32 %v2093, %v2133
    %v2135 = vpop.f32.mrb[0].mxu0
    %v2136 = vadd.f32 %v2095, %v2135
    %v2137 = vpop.f32.mrb[0].mxu0
    %v2138 = vpop.f32.mrb[0].mxu0
    %2139 = vdwg.mxu0
    %v2140 = vmul.f32 %v2134, 0.2
    %v2141 = vmul.f32 %v2136, 0.2
    %v2142 = vmax.f32 %v2134, %v2140
    %v2143 = vmax.f32 %v2136, %v2141
    %v2144 = vld [vmem:[%s5] sm:$0x3]
    %v2146 = vlaneseq
    %v2147 = vshrl.u32 %v2146, 7
    %v2148 = vsub.s32 0, %v2147
    %v2149 = vrot.slane %v2144, %v2148
    %v2150 = vlaneseq
    %v2151 = vshrl.u32 %v2150, 7
    %v2152 = vsub.s32 1, %v2151
    %v2153 = vrot.slane %v2144, %v2152
    %v2156 = vmul.f32 %v2142, %v2149
    %v2157 = vmul.f32 %v2143, %v2153
    %vm2158 = vcmask 1041408
    %v2159 = vsel %vm2158, %v2156, 0.0
    %v2160 = vsel %vm2158, %v2157, 0.0
    %v2161 = vadd.f32 %v2159, %v2160
    %2162 = vadd.xlane.f32.xlu0 %v2161
    %v2163 = vpop.xlane.xlu0 %2162
    %v2164 = vld [vmem:[#allocation2] sm:$0x1]
    %v2166 = vlaneseq
    %v2167 = vshrl.u32 %v2166, 7
    %v2168 = vsub.s32 0, %v2167
    %v2169 = vrot.slane %v2164, %v2168
    %v2171 = vadd.f32 %v2163, %v2169
    %v2172 = vxor.u32 %v2171, 2147483648
    %v2173 = vmul.f32 %v2172, 1.442695
    %v2174 = vpow.pop %v2173
    %v2175 = vadd.f32 %v2174, 1.0
    %v2176 = vrcp.pop %v2175
    %v2177 = vmul.f32 1.0, %v2176
    %vm2178 = vcmask 1024
    %2179 = vst.msk [vmem:[%s7] sm:$0x3] %vm2178, %v2177
    // Predicated region
    $region42: #{tpu_custom_call.1} parent=1 // pred_check
      _
    $region43: #{tpu_custom_call.1} parent=1 // pred_check_branch
      %2181 = sbr.rel (0) target = $region45
    $region44: #{tpu_custom_call.1} parent=1 // pred_region
      _
    $region45: #{tpu_custom_call.1} parent=1 // pred_fallthru
      _
    // Predicated region
    $region46: #{tpu_custom_call.1} parent=1 // pred_check
      _
    $region47: #{tpu_custom_call.1} parent=1 // pred_check_branch
      %2183 = sbr.rel (0) target = $region49
    $region48: #{tpu_custom_call.1} parent=1 // pred_region
      _
    $region49: #{tpu_custom_call.1} parent=1 // pred_fallthru
      _
    %2184 = vsyncpa [#allocation4], 1
    %2185 = vsyncpa [#allocation6], 1

</llo_original>
